<compile_context>
chip_gen: v5e
topology: v5e:2x2
jax: 0.10.0
libtpu: 0.0.40
codegen_flags: <defaults>
</compile_context>

<pallas_src>
import functools

import jax
import jax.numpy as jnp
from jax import lax
from jax.experimental import pallas as pl
from jax.experimental.pallas import tpu as pltpu

CONV_K = 5   # conv_kernal_size
POOL_K = 2   # pool_kernal_size
C1, C2, C3 = 16, 32, 64   # conv output channels


# ------------------------------ fused kernel --------------------------------

def _fcn_kernel(x_ref, w1_ref, b1_ref, w2_ref, b2_ref, w3_ref, b3_ref,
                wl_ref, bl_ref, o_ref,
                s1, a1, p2, s2, a2, p3, s3,
                *, K, L1, P1, L2, P2, L3, MPL3):
    # x_ref:  (DIM, 1)  one sample, channels-last column
    # w1_ref: (K, C1)        w2_ref: (K*C1, C2) bf16   w3_ref: (K*C2, C3) bf16
    # wl_ref: (MPL3, C3, O) bf16 (Linear weight pre-permuted for channel-major flatten)
    # o_ref:  (1, O)
    bf16 = jnp.bfloat16

    # ---- layer 1: Conv1d(1 -> C1, K) + bias + ReLU (VPU FIR) ---------------
    # Contraction depth is only K=5 -> 5 shifted multiply-adds on the VPU
    # instead of a degenerate MXU matmul.
    acc1 = x_ref[0:L1, :] * w1_ref[0:1, :]                 # (L1,1)*(1,C1) -> (L1,C1)
    for k in range(1, K):
        acc1 = acc1 + x_ref[k:k + L1, :] * w1_ref[k:k + 1, :]
    s1[...] = jnp.maximum(acc1 + b1_ref[...], 0.0)

    # ---- maxpool1: max of two stride-2 sublane reads -----------------------
    a1[...] = jnp.maximum(s1[pl.ds(0, P1, stride=2), :],
                          s1[pl.ds(1, P1, stride=2), :])

    # ---- layer 2: in-kernel im2col (static shifted slices) + one MXU matmul
    for k in range(K):
        p2[:, k * C1:(k + 1) * C1] = a1[k:k + L2, :]
    y2 = jnp.dot(p2[...].astype(bf16), w2_ref[...],
                 preferred_element_type=jnp.float32)
    s2[...] = jnp.maximum(y2 + b2_ref[...], 0.0)

    # ---- maxpool2 ----------------------------------------------------------
    a2[...] = jnp.maximum(s2[pl.ds(0, P2, stride=2), :],
                          s2[pl.ds(1, P2, stride=2), :])

    # ---- layer 3 ------------------------------------------------------------
    for k in range(K):
        p3[:, k * C2:(k + 1) * C2] = a2[k:k + L3, :]
    y3 = jnp.dot(p3[...].astype(bf16), w3_ref[...],
                 preferred_element_type=jnp.float32)
    s3[...] = jnp.maximum(y3 + b3_ref[...], 0.0)

    # ---- maxpool3 fused into the Linear -------------------------------------
    # torch's x.view(-1, 64*mpl3) flattens NCL channel-major; wl_ref was
    # pre-permuted to (MPL3, C3, O) so pooled position l contracts against its
    # own (C3, O) slab.  nn.Dropout() is identity in eval mode.
    # TODO(synk): training-mode dropout (p=0.5 Bernoulli mask) not implemented.
    acc_o = bl_ref[...]                                    # (1, O) f32
    for l in range(MPL3):
        row = jnp.maximum(s3[2 * l:2 * l + 1, :], s3[2 * l + 1:2 * l + 2, :])
        acc_o = acc_o + jnp.dot(row.astype(bf16), wl_ref[l],
                                preferred_element_type=jnp.float32)
    o_ref[...] = acc_o


# ------------------------------- wrapper -------------------------------------

def fcn_forward(params, x):
    """x: (B, Dim) float32 -> (B, centord_Vector_Length)."""
    B, dim = x.shape
    K, P = CONV_K, POOL_K
    L1 = dim - K + 1
    P1 = L1 // P
    L2 = P1 - K + 1
    P2 = L2 // P
    L3 = P2 - K + 1
    MPL3 = L3 // P
    O = params["wl"].shape[1]
    assert params["wl"].shape[0] == C3 * MPL3, (
        "Linear in_features disagrees with the actual flattened feature count")

    # Kernel-layout params (tiny plain-JAX prep, done once per call).
    w1f = params["w1"]                                      # (K, C1)  f32 (VPU FIR)
    w2f = params["w2"].astype(jnp.bfloat16)                 # (K*C1, C2)  MXU operand
    w3f = params["w3"].astype(jnp.bfloat16)                 # (K*C2, C3)
    wlr = jnp.transpose(params["wl"].reshape(C3, MPL3, O),
                        (1, 0, 2)).astype(jnp.bfloat16)     # (MPL3, C3, O)
    b1r = params["b1"].reshape(1, C1)
    b2r = params["b2"].reshape(1, C2)
    b3r = params["b3"].reshape(1, C3)
    blr = params["bl"].reshape(1, O)
    x3 = x.reshape(B, dim, 1)                               # per-sample (dim, 1) column

    kernel = functools.partial(_fcn_kernel, K=K, L1=L1, P1=P1, L2=L2, P2=P2,
                               L3=L3, MPL3=MPL3)

    out = pl.pallas_call(
        kernel,
        out_shape=jax.ShapeDtypeStruct((B, 1, O), jnp.float32),
        grid=(B,),
        in_specs=[
            pl.BlockSpec((None, dim, 1), lambda b: (b, 0, 0)),   # x  (one sample)
            pl.BlockSpec((K, C1), lambda b: (0, 0)),             # w1
            pl.BlockSpec((1, C1), lambda b: (0, 0)),             # b1
            pl.BlockSpec((K * C1, C2), lambda b: (0, 0)),        # w2
            pl.BlockSpec((1, C2), lambda b: (0, 0)),             # b2
            pl.BlockSpec((K * C2, C3), lambda b: (0, 0)),        # w3
            pl.BlockSpec((1, C3), lambda b: (0, 0)),             # b3
            pl.BlockSpec((MPL3, C3, O), lambda b: (0, 0, 0)),    # wl (permuted)
            pl.BlockSpec((1, O), lambda b: (0, 0)),              # bl
        ],
        out_specs=pl.BlockSpec((None, 1, O), lambda b: (b, 0, 0)),
        scratch_shapes=[
            pltpu.VMEM((L1, C1), jnp.float32),       # conv1 + relu output
            pltpu.VMEM((P1, C1), jnp.float32),       # pooled 1
            pltpu.VMEM((L2, K * C1), jnp.float32),   # im2col patches for conv2
            pltpu.VMEM((L2, C2), jnp.float32),       # conv2 + relu output
            pltpu.VMEM((P2, C2), jnp.float32),       # pooled 2
            pltpu.VMEM((L3, K * C2), jnp.float32),   # im2col patches for conv3
            pltpu.VMEM((L3, C3), jnp.float32),       # conv3 + relu output
        ],
        compiler_params=pltpu.CompilerParams(
            dimension_semantics=("parallel",)),      # engages both TCs on v7x
    )(x3, w1f, b1r, w2f, b2r, w3f, b3r, wlr, blr)
    return out.reshape(B, O)


# --------------------------- params / reference -----------------------------

def init_params(key, dim, centroid_len):
    """Deterministic init (PyTorch-style uniform(-1/sqrt(fan_in), +1/sqrt(fan_in)))."""
    ks = jax.random.split(key, 8)

    def u(k, shape, fan_in):
        bound = 1.0 / (fan_in ** 0.5)
        return jax.random.uniform(k, shape, jnp.float32, -bound, bound)

    # conv weights in PyTorch layout (Cout, Cin, K)
    w1 = u(ks[0], (C1, 1, CONV_K), 1 * CONV_K)
    w2 = u(ks[1], (C2, C1, CONV_K), C1 * CONV_K)
    w3 = u(ks[2], (C3, C2, CONV_K), C2 * CONV_K)
    b1 = u(ks[3], (C1,), 1 * CONV_K)
    b2 = u(ks[4], (C2,), C1 * CONV_K)
    b3 = u(ks[5], (C3,), C2 * CONV_K)

    # replicate the module's (float) length arithmetic ...
    cvo1 = (dim - CONV_K) / 1 + 1
    mpl1 = cvo1 / POOL_K
    cvo2 = (mpl1 - CONV_K) / 1 + 1
    mpl2 = cvo2 / POOL_K
    cvo3 = (mpl2 - CONV_K) / 1 + 1
    mpl3 = int(cvo3 / POOL_K)
    # ... and check it against exact integer conv/pool arithmetic
    l1 = dim - CONV_K + 1
    p1 = l1 // POOL_K
    l2 = p1 - CONV_K + 1
    p2 = l2 // POOL_K
    l3 = p2 - CONV_K + 1
    assert mpl3 == l3 // POOL_K, "module float-length arithmetic is inconsistent"
    in_feats = C3 * mpl3

    wl = u(ks[6], (in_feats, centroid_len), in_feats)   # stored as (F, O) = W.T
    bl = u(ks[7], (centroid_len,), in_feats)

    def flat(w_oik):  # (Cout, Cin, K) -> (K*Cin, Cout), patch index k*Cin + ci
        return jnp.transpose(w_oik, (2, 1, 0)).reshape(-1, w_oik.shape[0])

    return {
        "w1": flat(w1), "b1": b1, "w1_oik": w1,
        "w2": flat(w2), "b2": b2, "w2_oik": w2,
        "w3": flat(w3), "b3": b3, "w3_oik": w3,
        "wl": wl, "bl": bl, "mpl3": mpl3,
    }


def fcn_reference(params, x):
    """Pure-JAX/XLA f32 reference (eval-mode dropout)."""
    h = x[:, None, :]  # NCL

    def block(h, w_oik, b):
        y = lax.conv_general_dilated(h, w_oik, (1,), "VALID",
                                     dimension_numbers=("NCH", "OIH", "NCH"))
        y = jnp.maximum(y + b[None, :, None], 0.0)
        return lax.reduce_window(y, -jnp.inf, lax.max,
                                 (1, 1, POOL_K), (1, 1, POOL_K), "VALID")

    h = block(h, params["w1_oik"], params["b1"])
    h = block(h, params["w2_oik"], params["b2"])
    h = block(h, params["w3_oik"], params["b3"])
    feats = h.reshape(h.shape[0], -1)
    return feats @ params["wl"] + params["bl"][None, :]


# ---------------------------------- main ------------------------------------

if __name__ == "__main__":
    key = jax.random.PRNGKey(0)
    k_param, k_x = jax.random.split(key)

    DIM = 64            # Data_Vector_Length
    CENTROID_LEN = 8    # args.centord_Vector_Length
    BATCH = 2

    params = init_params(k_param, DIM, CENTROID_LEN)
    x = jax.random.normal(k_x, (BATCH, DIM), jnp.float32)

    out = jax.block_until_ready(fcn_forward(params, x))
    ref = jax.block_until_ready(fcn_reference(params, x))

    assert out.shape == (BATCH, CENTROID_LEN), out.shape
    # tolerance accounts for bf16 MXU operands (f32 accumulation) vs f32 reference
    assert jnp.allclose(out, ref, rtol=2e-2, atol=2e-2), (out, ref)

    print("KERNEL_OK")
</pallas_src>

<mosaic_0001>
module attributes {stable_mosaic.version = 11 : i64} {
  func.func @_fcn_kernel(%arg0: i32, %arg1: memref<1x64x1xf32, #tpu.memory_space<vmem>>, %arg2: memref<5x16xf32, #tpu.memory_space<vmem>>, %arg3: memref<1x16xf32, #tpu.memory_space<vmem>>, %arg4: memref<80x32xbf16, #tpu.memory_space<vmem>>, %arg5: memref<1x32xf32, #tpu.memory_space<vmem>>, %arg6: memref<160x64xbf16, #tpu.memory_space<vmem>>, %arg7: memref<1x64xf32, #tpu.memory_space<vmem>>, %arg8: memref<4x64x8xbf16, #tpu.memory_space<vmem>>, %arg9: memref<1x8xf32, #tpu.memory_space<vmem>>, %arg10: memref<1x1x8xf32, #tpu.memory_space<vmem>>, %arg11: memref<60x16xf32, #tpu.memory_space<vmem>>, %arg12: memref<30x16xf32, #tpu.memory_space<vmem>>, %arg13: memref<26x80xf32, #tpu.memory_space<vmem>>, %arg14: memref<26x32xf32, #tpu.memory_space<vmem>>, %arg15: memref<13x32xf32, #tpu.memory_space<vmem>>, %arg16: memref<9x160xf32, #tpu.memory_space<vmem>>, %arg17: memref<9x64xf32, #tpu.memory_space<vmem>>) attributes {dimension_semantics = [#tpu.dimension_semantics<parallel>], iteration_bounds = array<i64: 2>, scalar_prefetch = 0 : i64, scratch_operands = 7 : i64, tpu.core_type = #tpu.core_type<tc>, window_params = [{transform_indices = @transform_0, window_bounds = array<i64: 1, 64, 1>}, {pipeline_mode = #tpu.pipeline_mode<synchronous>, transform_indices = @transform_1, window_bounds = array<i64: 5, 16>}, {pipeline_mode = #tpu.pipeline_mode<synchronous>, transform_indices = @transform_2, window_bounds = array<i64: 1, 16>}, {pipeline_mode = #tpu.pipeline_mode<synchronous>, transform_indices = @transform_3, window_bounds = array<i64: 80, 32>}, {pipeline_mode = #tpu.pipeline_mode<synchronous>, transform_indices = @transform_4, window_bounds = array<i64: 1, 32>}, {pipeline_mode = #tpu.pipeline_mode<synchronous>, transform_indices = @transform_5, window_bounds = array<i64: 160, 64>}, {pipeline_mode = #tpu.pipeline_mode<synchronous>, transform_indices = @transform_6, window_bounds = array<i64: 1, 64>}, {pipeline_mode = #tpu.pipeline_mode<synchronous>, transform_indices = @transform_7, window_bounds = array<i64: 4, 64, 8>}, {pipeline_mode = #tpu.pipeline_mode<synchronous>, transform_indices = @transform_8, window_bounds = array<i64: 1, 8>}, {transform_indices = @transform_9, window_bounds = array<i64: 1, 1, 8>}]} {
    %c0 = arith.constant 0 : index
    %c0_0 = arith.constant 0 : index
    %c0_1 = arith.constant 0 : index
    %0 = vector.load %arg1[%c0, %c0_0, %c0_1] : memref<1x64x1xf32, #tpu.memory_space<vmem>>, vector<1x60x1xf32>
    %1 = vector.shape_cast %0 : vector<1x60x1xf32> to vector<60x1xf32>
    %c0_2 = arith.constant 0 : index
    %c0_3 = arith.constant 0 : index
    %2 = vector.load %arg2[%c0_2, %c0_3] : memref<5x16xf32, #tpu.memory_space<vmem>>, vector<1x16xf32>
    %3 = vector.broadcast %1 : vector<60x1xf32> to vector<60x16xf32>
    %4 = vector.broadcast %2 : vector<1x16xf32> to vector<60x16xf32>
    %5 = arith.mulf %3, %4 : vector<60x16xf32>
    %c0_4 = arith.constant 0 : index
    %c1 = arith.constant 1 : index
    %c0_5 = arith.constant 0 : index
    %6 = vector.load %arg1[%c0_4, %c1, %c0_5] : memref<1x64x1xf32, #tpu.memory_space<vmem>>, vector<1x60x1xf32>
    %7 = vector.shape_cast %6 : vector<1x60x1xf32> to vector<60x1xf32>
    %c1_6 = arith.constant 1 : index
    %c0_7 = arith.constant 0 : index
    %8 = vector.load %arg2[%c1_6, %c0_7] : memref<5x16xf32, #tpu.memory_space<vmem>>, vector<1x16xf32>
    %9 = vector.broadcast %7 : vector<60x1xf32> to vector<60x16xf32>
    %10 = vector.broadcast %8 : vector<1x16xf32> to vector<60x16xf32>
    %11 = arith.mulf %9, %10 : vector<60x16xf32>
    %12 = arith.addf %5, %11 : vector<60x16xf32>
    %c0_8 = arith.constant 0 : index
    %c2 = arith.constant 2 : index
    %c0_9 = arith.constant 0 : index
    %13 = vector.load %arg1[%c0_8, %c2, %c0_9] : memref<1x64x1xf32, #tpu.memory_space<vmem>>, vector<1x60x1xf32>
    %14 = vector.shape_cast %13 : vector<1x60x1xf32> to vector<60x1xf32>
    %c2_10 = arith.constant 2 : index
    %c0_11 = arith.constant 0 : index
    %15 = vector.load %arg2[%c2_10, %c0_11] : memref<5x16xf32, #tpu.memory_space<vmem>>, vector<1x16xf32>
    %16 = vector.broadcast %14 : vector<60x1xf32> to vector<60x16xf32>
    %17 = vector.broadcast %15 : vector<1x16xf32> to vector<60x16xf32>
    %18 = arith.mulf %16, %17 : vector<60x16xf32>
    %19 = arith.addf %12, %18 : vector<60x16xf32>
    %c0_12 = arith.constant 0 : index
    %c3 = arith.constant 3 : index
    %c0_13 = arith.constant 0 : index
    %20 = vector.load %arg1[%c0_12, %c3, %c0_13] : memref<1x64x1xf32, #tpu.memory_space<vmem>>, vector<1x60x1xf32>
    %21 = vector.shape_cast %20 : vector<1x60x1xf32> to vector<60x1xf32>
    %c3_14 = arith.constant 3 : index
    %c0_15 = arith.constant 0 : index
    %22 = vector.load %arg2[%c3_14, %c0_15] : memref<5x16xf32, #tpu.memory_space<vmem>>, vector<1x16xf32>
    %23 = vector.broadcast %21 : vector<60x1xf32> to vector<60x16xf32>
    %24 = vector.broadcast %22 : vector<1x16xf32> to vector<60x16xf32>
    %25 = arith.mulf %23, %24 : vector<60x16xf32>
    %26 = arith.addf %19, %25 : vector<60x16xf32>
    %c0_16 = arith.constant 0 : index
    %c4 = arith.constant 4 : index
    %c0_17 = arith.constant 0 : index
    %27 = vector.load %arg1[%c0_16, %c4, %c0_17] : memref<1x64x1xf32, #tpu.memory_space<vmem>>, vector<1x60x1xf32>
    %28 = vector.shape_cast %27 : vector<1x60x1xf32> to vector<60x1xf32>
    %c4_18 = arith.constant 4 : index
    %c0_19 = arith.constant 0 : index
    %29 = vector.load %arg2[%c4_18, %c0_19] : memref<5x16xf32, #tpu.memory_space<vmem>>, vector<1x16xf32>
    %30 = vector.broadcast %28 : vector<60x1xf32> to vector<60x16xf32>
    %31 = vector.broadcast %29 : vector<1x16xf32> to vector<60x16xf32>
    %32 = arith.mulf %30, %31 : vector<60x16xf32>
    %33 = arith.addf %26, %32 : vector<60x16xf32>
    %c0_20 = arith.constant 0 : index
    %c0_21 = arith.constant 0 : index
    %34 = vector.load %arg3[%c0_20, %c0_21] : memref<1x16xf32, #tpu.memory_space<vmem>>, vector<1x16xf32>
    %35 = vector.broadcast %34 : vector<1x16xf32> to vector<60x16xf32>
    %36 = arith.addf %33, %35 : vector<60x16xf32>
    %cst = arith.constant 0.000000e+00 : f32
    %37 = vector.broadcast %cst : f32 to vector<60x16xf32>
    %38 = arith.maximumf %36, %37 : vector<60x16xf32>
    %c0_22 = arith.constant 0 : index
    %c0_23 = arith.constant 0 : index
    %39 = vector.load %arg11[%c0_22, %c0_23] : memref<60x16xf32, #tpu.memory_space<vmem>>, vector<60x16xf32>
    tpu.vector_store %arg11[%c0_22, %c0_23], %38 {strides = array<i32>} : memref<60x16xf32, #tpu.memory_space<vmem>>, vector<60x16xf32>,
    %c0_24 = arith.constant 0 : index
    %c0_25 = arith.constant 0 : index
    %40 = tpu.strided_load %arg11[%c0_24, %c0_25] {strides = array<i32: 2, 1>} : memref<60x16xf32, #tpu.memory_space<vmem>>, vector<30x16xf32>
    %c1_26 = arith.constant 1 : index
    %c0_27 = arith.constant 0 : index
    %41 = tpu.strided_load %arg11[%c1_26, %c0_27] {strides = array<i32: 2, 1>} : memref<60x16xf32, #tpu.memory_space<vmem>>, vector<30x16xf32>
    %42 = arith.maximumf %40, %41 : vector<30x16xf32>
    %c0_28 = arith.constant 0 : index
    %c0_29 = arith.constant 0 : index
    %43 = vector.load %arg12[%c0_28, %c0_29] : memref<30x16xf32, #tpu.memory_space<vmem>>, vector<30x16xf32>
    tpu.vector_store %arg12[%c0_28, %c0_29], %42 {strides = array<i32>} : memref<30x16xf32, #tpu.memory_space<vmem>>, vector<30x16xf32>,
    %c0_30 = arith.constant 0 : index
    %c0_31 = arith.constant 0 : index
    %44 = vector.load %arg12[%c0_30, %c0_31] : memref<30x16xf32, #tpu.memory_space<vmem>>, vector<26x16xf32>
    %c0_32 = arith.constant 0 : index
    %c0_33 = arith.constant 0 : index
    %45 = vector.load %arg13[%c0_32, %c0_33] : memref<26x80xf32, #tpu.memory_space<vmem>>, vector<26x16xf32>
    tpu.vector_store %arg13[%c0_32, %c0_33], %44 {strides = array<i32>} : memref<26x80xf32, #tpu.memory_space<vmem>>, vector<26x16xf32>,
    %c1_34 = arith.constant 1 : index
    %c0_35 = arith.constant 0 : index
    %46 = vector.load %arg12[%c1_34, %c0_35] : memref<30x16xf32, #tpu.memory_space<vmem>>, vector<26x16xf32>
    %c0_36 = arith.constant 0 : index
    %c16 = arith.constant 16 : index
    %47 = vector.load %arg13[%c0_36, %c16] : memref<26x80xf32, #tpu.memory_space<vmem>>, vector<26x16xf32>
    tpu.vector_store %arg13[%c0_36, %c16], %46 {strides = array<i32>} : memref<26x80xf32, #tpu.memory_space<vmem>>, vector<26x16xf32>,
    %c2_37 = arith.constant 2 : index
    %c0_38 = arith.constant 0 : index
    %48 = vector.load %arg12[%c2_37, %c0_38] : memref<30x16xf32, #tpu.memory_space<vmem>>, vector<26x16xf32>
    %c0_39 = arith.constant 0 : index
    %c32 = arith.constant 32 : index
    %49 = vector.load %arg13[%c0_39, %c32] : memref<26x80xf32, #tpu.memory_space<vmem>>, vector<26x16xf32>
    tpu.vector_store %arg13[%c0_39, %c32], %48 {strides = array<i32>} : memref<26x80xf32, #tpu.memory_space<vmem>>, vector<26x16xf32>,
    %c3_40 = arith.constant 3 : index
    %c0_41 = arith.constant 0 : index
    %50 = vector.load %arg12[%c3_40, %c0_41] : memref<30x16xf32, #tpu.memory_space<vmem>>, vector<26x16xf32>
    %c0_42 = arith.constant 0 : index
    %c48 = arith.constant 48 : index
    %51 = vector.load %arg13[%c0_42, %c48] : memref<26x80xf32, #tpu.memory_space<vmem>>, vector<26x16xf32>
    tpu.vector_store %arg13[%c0_42, %c48], %50 {strides = array<i32>} : memref<26x80xf32, #tpu.memory_space<vmem>>, vector<26x16xf32>,
    %c4_43 = arith.constant 4 : index
    %c0_44 = arith.constant 0 : index
    %52 = vector.load %arg12[%c4_43, %c0_44] : memref<30x16xf32, #tpu.memory_space<vmem>>, vector<26x16xf32>
    %c0_45 = arith.constant 0 : index
    %c64 = arith.constant 64 : index
    %53 = vector.load %arg13[%c0_45, %c64] : memref<26x80xf32, #tpu.memory_space<vmem>>, vector<26x16xf32>
    tpu.vector_store %arg13[%c0_45, %c64], %52 {strides = array<i32>} : memref<26x80xf32, #tpu.memory_space<vmem>>, vector<26x16xf32>,
    %c0_46 = arith.constant 0 : index
    %c0_47 = arith.constant 0 : index
    %54 = vector.load %arg13[%c0_46, %c0_47] : memref<26x80xf32, #tpu.memory_space<vmem>>, vector<26x80xf32>
    %55 = arith.truncf %54 : vector<26x80xf32> to vector<26x80xbf16>
    %c0_48 = arith.constant 0 : index
    %c0_49 = arith.constant 0 : index
    %56 = vector.load %arg4[%c0_48, %c0_49] : memref<80x32xbf16, #tpu.memory_space<vmem>>, vector<80x32xbf16>
    %cst_50 = arith.constant dense<0.000000e+00> : vector<26x32xf32>
    %57 = tpu.matmul %55, %56, %cst_50 {dimension_numbers = #tpu.dot_dimension_numbers<[1], [0], [0], [1], [0, 0, 1, 1], [], []>} : vector<26x80xbf16>, vector<80x32xbf16>, vector<26x32xf32> -> vector<26x32xf32>
    %c0_51 = arith.constant 0 : index
    %c0_52 = arith.constant 0 : index
    %58 = vector.load %arg5[%c0_51, %c0_52] : memref<1x32xf32, #tpu.memory_space<vmem>>, vector<1x32xf32>
    %59 = vector.broadcast %58 : vector<1x32xf32> to vector<26x32xf32>
    %60 = arith.addf %57, %59 : vector<26x32xf32>
    %cst_53 = arith.constant 0.000000e+00 : f32
    %61 = vector.broadcast %cst_53 : f32 to vector<26x32xf32>
    %62 = arith.maximumf %60, %61 : vector<26x32xf32>
    %c0_54 = arith.constant 0 : index
    %c0_55 = arith.constant 0 : index
    %63 = vector.load %arg14[%c0_54, %c0_55] : memref<26x32xf32, #tpu.memory_space<vmem>>, vector<26x32xf32>
    tpu.vector_store %arg14[%c0_54, %c0_55], %62 {strides = array<i32>} : memref<26x32xf32, #tpu.memory_space<vmem>>, vector<26x32xf32>,
    %c0_56 = arith.constant 0 : index
    %c0_57 = arith.constant 0 : index
    %64 = tpu.strided_load %arg14[%c0_56, %c0_57] {strides = array<i32: 2, 1>} : memref<26x32xf32, #tpu.memory_space<vmem>>, vector<13x32xf32>
    %c1_58 = arith.constant 1 : index
    %c0_59 = arith.constant 0 : index
    %65 = tpu.strided_load %arg14[%c1_58, %c0_59] {strides = array<i32: 2, 1>} : memref<26x32xf32, #tpu.memory_space<vmem>>, vector<13x32xf32>
    %66 = arith.maximumf %64, %65 : vector<13x32xf32>
    %c0_60 = arith.constant 0 : index
    %c0_61 = arith.constant 0 : index
    %67 = vector.load %arg15[%c0_60, %c0_61] : memref<13x32xf32, #tpu.memory_space<vmem>>, vector<13x32xf32>
    tpu.vector_store %arg15[%c0_60, %c0_61], %66 {strides = array<i32>} : memref<13x32xf32, #tpu.memory_space<vmem>>, vector<13x32xf32>,
    %c0_62 = arith.constant 0 : index
    %c0_63 = arith.constant 0 : index
    %68 = vector.load %arg15[%c0_62, %c0_63] : memref<13x32xf32, #tpu.memory_space<vmem>>, vector<9x32xf32>
    %c0_64 = arith.constant 0 : index
    %c0_65 = arith.constant 0 : index
    %69 = vector.load %arg16[%c0_64, %c0_65] : memref<9x160xf32, #tpu.memory_space<vmem>>, vector<9x32xf32>
    tpu.vector_store %arg16[%c0_64, %c0_65], %68 {strides = array<i32>} : memref<9x160xf32, #tpu.memory_space<vmem>>, vector<9x32xf32>,
    %c1_66 = arith.constant 1 : index
    %c0_67 = arith.constant 0 : index
    %70 = vector.load %arg15[%c1_66, %c0_67] : memref<13x32xf32, #tpu.memory_space<vmem>>, vector<9x32xf32>
    %c0_68 = arith.constant 0 : index
    %c32_69 = arith.constant 32 : index
    %71 = vector.load %arg16[%c0_68, %c32_69] : memref<9x160xf32, #tpu.memory_space<vmem>>, vector<9x32xf32>
    tpu.vector_store %arg16[%c0_68, %c32_69], %70 {strides = array<i32>} : memref<9x160xf32, #tpu.memory_space<vmem>>, vector<9x32xf32>,
    %c2_70 = arith.constant 2 : index
    %c0_71 = arith.constant 0 : index
    %72 = vector.load %arg15[%c2_70, %c0_71] : memref<13x32xf32, #tpu.memory_space<vmem>>, vector<9x32xf32>
    %c0_72 = arith.constant 0 : index
    %c64_73 = arith.constant 64 : index
    %73 = vector.load %arg16[%c0_72, %c64_73] : memref<9x160xf32, #tpu.memory_space<vmem>>, vector<9x32xf32>
    tpu.vector_store %arg16[%c0_72, %c64_73], %72 {strides = array<i32>} : memref<9x160xf32, #tpu.memory_space<vmem>>, vector<9x32xf32>,
    %c3_74 = arith.constant 3 : index
    %c0_75 = arith.constant 0 : index
    %74 = vector.load %arg15[%c3_74, %c0_75] : memref<13x32xf32, #tpu.memory_space<vmem>>, vector<9x32xf32>
    %c0_76 = arith.constant 0 : index
    %c96 = arith.constant 96 : index
    %75 = vector.load %arg16[%c0_76, %c96] : memref<9x160xf32, #tpu.memory_space<vmem>>, vector<9x32xf32>
    tpu.vector_store %arg16[%c0_76, %c96], %74 {strides = array<i32>} : memref<9x160xf32, #tpu.memory_space<vmem>>, vector<9x32xf32>,
    %c4_77 = arith.constant 4 : index
    %c0_78 = arith.constant 0 : index
    %76 = vector.load %arg15[%c4_77, %c0_78] : memref<13x32xf32, #tpu.memory_space<vmem>>, vector<9x32xf32>
    %c0_79 = arith.constant 0 : index
    %c128 = arith.constant 128 : index
    %77 = vector.load %arg16[%c0_79, %c128] : memref<9x160xf32, #tpu.memory_space<vmem>>, vector<9x32xf32>
    tpu.vector_store %arg16[%c0_79, %c128], %76 {strides = array<i32>} : memref<9x160xf32, #tpu.memory_space<vmem>>, vector<9x32xf32>,
    %c0_80 = arith.constant 0 : index
    %c0_81 = arith.constant 0 : index
    %78 = vector.load %arg16[%c0_80, %c0_81] : memref<9x160xf32, #tpu.memory_space<vmem>>, vector<9x160xf32>
    %79 = arith.truncf %78 : vector<9x160xf32> to vector<9x160xbf16>
    %c0_82 = arith.constant 0 : index
    %c0_83 = arith.constant 0 : index
    %80 = vector.load %arg6[%c0_82, %c0_83] : memref<160x64xbf16, #tpu.memory_space<vmem>>, vector<160x64xbf16>
    %cst_84 = arith.constant dense<0.000000e+00> : vector<9x64xf32>
    %81 = tpu.matmul %79, %80, %cst_84 {dimension_numbers = #tpu.dot_dimension_numbers<[1], [0], [0], [1], [0, 0, 1, 1], [], []>} : vector<9x160xbf16>, vector<160x64xbf16>, vector<9x64xf32> -> vector<9x64xf32>
    %c0_85 = arith.constant 0 : index
    %c0_86 = arith.constant 0 : index
    %82 = vector.load %arg7[%c0_85, %c0_86] : memref<1x64xf32, #tpu.memory_space<vmem>>, vector<1x64xf32>
    %83 = vector.broadcast %82 : vector<1x64xf32> to vector<9x64xf32>
    %84 = arith.addf %81, %83 : vector<9x64xf32>
    %cst_87 = arith.constant 0.000000e+00 : f32
    %85 = vector.broadcast %cst_87 : f32 to vector<9x64xf32>
    %86 = arith.maximumf %84, %85 : vector<9x64xf32>
    %c0_88 = arith.constant 0 : index
    %c0_89 = arith.constant 0 : index
    %87 = vector.load %arg17[%c0_88, %c0_89] : memref<9x64xf32, #tpu.memory_space<vmem>>, vector<9x64xf32>
    tpu.vector_store %arg17[%c0_88, %c0_89], %86 {strides = array<i32>} : memref<9x64xf32, #tpu.memory_space<vmem>>, vector<9x64xf32>,
    %c0_90 = arith.constant 0 : index
    %c0_91 = arith.constant 0 : index
    %88 = vector.load %arg9[%c0_90, %c0_91] : memref<1x8xf32, #tpu.memory_space<vmem>>, vector<1x8xf32>
    %c0_92 = arith.constant 0 : index
    %c0_93 = arith.constant 0 : index
    %89 = vector.load %arg17[%c0_92, %c0_93] : memref<9x64xf32, #tpu.memory_space<vmem>>, vector<1x64xf32>
    %c1_94 = arith.constant 1 : index
    %c0_95 = arith.constant 0 : index
    %90 = vector.load %arg17[%c1_94, %c0_95] : memref<9x64xf32, #tpu.memory_space<vmem>>, vector<1x64xf32>
    %91 = arith.maximumf %89, %90 : vector<1x64xf32>
    %92 = arith.truncf %91 : vector<1x64xf32> to vector<1x64xbf16>
    %c0_96 = arith.constant 0 : index
    %c0_97 = arith.constant 0 : index
    %c0_98 = arith.constant 0 : index
    %93 = vector.load %arg8[%c0_96, %c0_97, %c0_98] : memref<4x64x8xbf16, #tpu.memory_space<vmem>>, vector<1x64x8xbf16>
    %94 = vector.shape_cast %93 : vector<1x64x8xbf16> to vector<64x8xbf16>
    %cst_99 = arith.constant dense<0.000000e+00> : vector<1x8xf32>
    %95 = tpu.matmul %92, %94, %cst_99 {dimension_numbers = #tpu.dot_dimension_numbers<[1], [0], [0], [1], [0, 0, 1, 1], [], []>} : vector<1x64xbf16>, vector<64x8xbf16>, vector<1x8xf32> -> vector<1x8xf32>
    %96 = arith.addf %88, %95 : vector<1x8xf32>
    %c2_100 = arith.constant 2 : index
    %c0_101 = arith.constant 0 : index
    %97 = vector.load %arg17[%c2_100, %c0_101] : memref<9x64xf32, #tpu.memory_space<vmem>>, vector<1x64xf32>
    %c3_102 = arith.constant 3 : index
    %c0_103 = arith.constant 0 : index
    %98 = vector.load %arg17[%c3_102, %c0_103] : memref<9x64xf32, #tpu.memory_space<vmem>>, vector<1x64xf32>
    %99 = arith.maximumf %97, %98 : vector<1x64xf32>
    %100 = arith.truncf %99 : vector<1x64xf32> to vector<1x64xbf16>
    %c1_104 = arith.constant 1 : index
    %c0_105 = arith.constant 0 : index
    %c0_106 = arith.constant 0 : index
    %101 = vector.load %arg8[%c1_104, %c0_105, %c0_106] : memref<4x64x8xbf16, #tpu.memory_space<vmem>>, vector<1x64x8xbf16>
    %102 = vector.shape_cast %101 : vector<1x64x8xbf16> to vector<64x8xbf16>
    %cst_107 = arith.constant dense<0.000000e+00> : vector<1x8xf32>
    %103 = tpu.matmul %100, %102, %cst_107 {dimension_numbers = #tpu.dot_dimension_numbers<[1], [0], [0], [1], [0, 0, 1, 1], [], []>} : vector<1x64xbf16>, vector<64x8xbf16>, vector<1x8xf32> -> vector<1x8xf32>
    %104 = arith.addf %96, %103 : vector<1x8xf32>
    %c4_108 = arith.constant 4 : index
    %c0_109 = arith.constant 0 : index
    %105 = vector.load %arg17[%c4_108, %c0_109] : memref<9x64xf32, #tpu.memory_space<vmem>>, vector<1x64xf32>
    %c5 = arith.constant 5 : index
    %c0_110 = arith.constant 0 : index
    %106 = vector.load %arg17[%c5, %c0_110] : memref<9x64xf32, #tpu.memory_space<vmem>>, vector<1x64xf32>
    %107 = arith.maximumf %105, %106 : vector<1x64xf32>
    %108 = arith.truncf %107 : vector<1x64xf32> to vector<1x64xbf16>
    %c2_111 = arith.constant 2 : index
    %c0_112 = arith.constant 0 : index
    %c0_113 = arith.constant 0 : index
    %109 = vector.load %arg8[%c2_111, %c0_112, %c0_113] : memref<4x64x8xbf16, #tpu.memory_space<vmem>>, vector<1x64x8xbf16>
    %110 = vector.shape_cast %109 : vector<1x64x8xbf16> to vector<64x8xbf16>
    %cst_114 = arith.constant dense<0.000000e+00> : vector<1x8xf32>
    %111 = tpu.matmul %108, %110, %cst_114 {dimension_numbers = #tpu.dot_dimension_numbers<[1], [0], [0], [1], [0, 0, 1, 1], [], []>} : vector<1x64xbf16>, vector<64x8xbf16>, vector<1x8xf32> -> vector<1x8xf32>
    %112 = arith.addf %104, %111 : vector<1x8xf32>
    %c6 = arith.constant 6 : index
    %c0_115 = arith.constant 0 : index
    %113 = vector.load %arg17[%c6, %c0_115] : memref<9x64xf32, #tpu.memory_space<vmem>>, vector<1x64xf32>
    %c7 = arith.constant 7 : index
    %c0_116 = arith.constant 0 : index
    %114 = vector.load %arg17[%c7, %c0_116] : memref<9x64xf32, #tpu.memory_space<vmem>>, vector<1x64xf32>
    %115 = arith.maximumf %113, %114 : vector<1x64xf32>
    %116 = arith.truncf %115 : vector<1x64xf32> to vector<1x64xbf16>
    %c3_117 = arith.constant 3 : index
    %c0_118 = arith.constant 0 : index
    %c0_119 = arith.constant 0 : index
    %117 = vector.load %arg8[%c3_117, %c0_118, %c0_119] : memref<4x64x8xbf16, #tpu.memory_space<vmem>>, vector<1x64x8xbf16>
    %118 = vector.shape_cast %117 : vector<1x64x8xbf16> to vector<64x8xbf16>
    %cst_120 = arith.constant dense<0.000000e+00> : vector<1x8xf32>
    %119 = tpu.matmul %116, %118, %cst_120 {dimension_numbers = #tpu.dot_dimension_numbers<[1], [0], [0], [1], [0, 0, 1, 1], [], []>} : vector<1x64xbf16>, vector<64x8xbf16>, vector<1x8xf32> -> vector<1x8xf32>
    %120 = arith.addf %112, %119 : vector<1x8xf32>
    %c0_121 = arith.constant 0 : index
    %c0_122 = arith.constant 0 : index
    %c0_123 = arith.constant 0 : index
    %121 = vector.load %arg10[%c0_121, %c0_122, %c0_123] : memref<1x1x8xf32, #tpu.memory_space<vmem>>, vector<1x1x8xf32>
    %122 = vector.shape_cast %121 : vector<1x1x8xf32> to vector<1x8xf32>
    %123 = vector.shape_cast %120 : vector<1x8xf32> to vector<1x1x8xf32>
    tpu.vector_store %arg10[%c0_121, %c0_122, %c0_123], %123 {strides = array<i32>} : memref<1x1x8xf32, #tpu.memory_space<vmem>>, vector<1x1x8xf32>,
    return
  }
  func.func @transform_0(%arg0: i32) -> (i32, i32, i32) {
    %c0_i32 = arith.constant 0 : i32
    %c0_i32_0 = arith.constant 0 : i32
    %c0_i32_1 = arith.constant 0 : i32
    return %arg0, %c0_i32, %c0_i32_0 : i32, i32, i32
  }
  func.func @transform_1(%arg0: i32) -> (i32, i32) {
    %c0_i32 = arith.constant 0 : i32
    %c0_i32_0 = arith.constant 0 : i32
    %c0_i32_1 = arith.constant 0 : i32
    return %c0_i32, %c0_i32_0 : i32, i32
  }
  func.func @transform_2(%arg0: i32) -> (i32, i32) {
    %c0_i32 = arith.constant 0 : i32
    %c0_i32_0 = arith.constant 0 : i32
    %c0_i32_1 = arith.constant 0 : i32
    return %c0_i32, %c0_i32_0 : i32, i32
  }
  func.func @transform_3(%arg0: i32) -> (i32, i32) {
    %c0_i32 = arith.constant 0 : i32
    %c0_i32_0 = arith.constant 0 : i32
    %c0_i32_1 = arith.constant 0 : i32
    return %c0_i32, %c0_i32_0 : i32, i32
  }
  func.func @transform_4(%arg0: i32) -> (i32, i32) {
    %c0_i32 = arith.constant 0 : i32
    %c0_i32_0 = arith.constant 0 : i32
    %c0_i32_1 = arith.constant 0 : i32
    return %c0_i32, %c0_i32_0 : i32, i32
  }
  func.func @transform_5(%arg0: i32) -> (i32, i32) {
    %c0_i32 = arith.constant 0 : i32
    %c0_i32_0 = arith.constant 0 : i32
    %c0_i32_1 = arith.constant 0 : i32
    return %c0_i32, %c0_i32_0 : i32, i32
  }
  func.func @transform_6(%arg0: i32) -> (i32, i32) {
    %c0_i32 = arith.constant 0 : i32
    %c0_i32_0 = arith.constant 0 : i32
    %c0_i32_1 = arith.constant 0 : i32
    return %c0_i32, %c0_i32_0 : i32, i32
  }
  func.func @transform_7(%arg0: i32) -> (i32, i32, i32) {
    %c0_i32 = arith.constant 0 : i32
    %c0_i32_0 = arith.constant 0 : i32
    %c0_i32_1 = arith.constant 0 : i32
    %c0_i32_2 = arith.constant 0 : i32
    return %c0_i32, %c0_i32_0, %c0_i32_1 : i32, i32, i32
  }
  func.func @transform_8(%arg0: i32) -> (i32, i32) {
    %c0_i32 = arith.constant 0 : i32
    %c0_i32_0 = arith.constant 0 : i32
    %c0_i32_1 = arith.constant 0 : i32
    return %c0_i32, %c0_i32_0 : i32, i32
  }
  func.func @transform_9(%arg0: i32) -> (i32, i32, i32) {
    %c0_i32 = arith.constant 0 : i32
    %c0_i32_0 = arith.constant 0 : i32
    %c0_i32_1 = arith.constant 0 : i32
    return %arg0, %c0_i32, %c0_i32_0 : i32, i32, i32
  }
}

</mosaic_0001>

<llo_original>
// kernel: tpu_custom_call.1
$region0: #{tpu_custom_call.1}
  #allocation0 [shape = 'u32[]', space=smem, size = 0x4, offset = 0x4, fixed_abs, tag = 'smem constant byte address 0x4 - core index']
  #allocation1 [shape = 'u32[72,128]{1,0:T(1,128)}', space=vmem, size = 0x9000, scoped, tag = 'internal scratch']
  #allocation2 [shape = 'f32[60,16]{1,0:T(8,128)}', space=vmem, size = 0x8000, scoped, tag = 'scratch operand']
  #allocation3 [shape = 'f32[30,16]{1,0:T(8,128)}', space=vmem, size = 0x4000, scoped, tag = 'scratch operand']
  #allocation4 [shape = 'f32[26,80]{1,0:T(8,128)}', space=vmem, size = 0x4000, scoped, tag = 'scratch operand']
  #allocation5 [shape = 'f32[26,32]{1,0:T(8,128)}', space=vmem, size = 0x4000, scoped, tag = 'scratch operand']
  #allocation6 [shape = 'f32[13,32]{1,0:T(8,128)}', space=vmem, size = 0x2000, scoped, tag = 'scratch operand']
  #allocation7 [shape = 'f32[9,160]{1,0:T(8,128)}', space=vmem, size = 0x4000, scoped, tag = 'scratch operand']
  #allocation8 [shape = 'f32[9,64]{1,0:T(8,128)}', space=vmem, size = 0x2000, scoped, tag = 'scratch operand']
  %s0 = inlined_call_operand.vmem [shape: f32[2,64,1], index: 0, kind: input, shape index: {}]
  %s1 = inlined_call_operand.vmem [shape: f32[5,16], index: 1, kind: input, shape index: {}]
  %s2 = inlined_call_operand.vmem [shape: f32[1,16], index: 2, kind: input, shape index: {}]
  %s3 = inlined_call_operand.vmem [shape: bf16[80,32], index: 3, kind: input, shape index: {}]
  %s4 = inlined_call_operand.vmem [shape: f32[1,32], index: 4, kind: input, shape index: {}]
  %s5 = inlined_call_operand.vmem [shape: bf16[160,64], index: 5, kind: input, shape index: {}]
  %s6 = inlined_call_operand.vmem [shape: f32[1,64], index: 6, kind: input, shape index: {}]
  %s7 = inlined_call_operand.vmem [shape: bf16[4,64,8], index: 7, kind: input, shape index: {}]
  %s8 = inlined_call_operand.vmem [shape: f32[1,8], index: 8, kind: input, shape index: {}]
  %s9 = inlined_call_operand.hbm [shape: f32[2,1,8], index: 9, kind: output, shape index: {}]
  %s10 = sld [smem:[#allocation0]]
  $region69: #{tpu_custom_call.1} parent=0
    _
  %s12 = ssub.s32 1, %s10
  %s13 = scalar_select 0, %s12, %s10
  $region1: #{tpu_custom_call.1} parent=0
    #allocation9 [shape = 'u8[1024]{0}', space=vmem, size = 0x400, scoped, tag = 'output window, operand 0']
    #allocation10 [shape = 's32[2]{0}', space=sflag, size = 0x8, scoped, tag = 'scoped memory for tpu_custom_call.1']
    %14 = vsyncpa [#allocation10], 0
    %s15 = scalar_lea.sflag [#allocation10], 1
    %16 = vsyncpa %s15, 0
    loop: start=0, step=1, limit=4
    $region2: #{tpu_custom_call.1} parent=1 // loop_pre_header
      _
    $region3: #{tpu_custom_call.1} parent=1 // loop_header
      %s18 = sphi 0, %s22
      %p19 = scmp.ge.s32.totalorder %s18, 4
      %s28 = sphi 0, %s30
      %s31 = sphi 0, %s28
      %s32 = sphi 0, %s31
      %s48 = sphi 0, %s32
      %s52 = sphi 0, %s52
      %s54 = sphi 0, %s52
      %s55 = sphi 0, %s54
      %s69 = sphi 0, %s55
      %s73 = sphi 0, %s73
      %s75 = sphi 0, %s73
      %s76 = sphi 0, %s75
      %s90 = sphi 0, %s76
      %s94 = sphi 0, %s94
      %s96 = sphi 0, %s94
      %s97 = sphi 0, %s96
      %s111 = sphi 0, %s97
      %s115 = sphi 0, %s115
      %s117 = sphi 0, %s115
      %s118 = sphi 0, %s117
      %s132 = sphi 0, %s118
      %s136 = sphi 0, %s136
      %s138 = sphi 0, %s136
      %s139 = sphi 0, %s138
      %s153 = sphi 0, %s139
      %s157 = sphi 0, %s157
      %s159 = sphi 0, %s157
      %s160 = sphi 0, %s159
      %s174 = sphi 0, %s160
      %s178 = sphi 0, %s178
      %s180 = sphi 0, %s178
      %s181 = sphi 0, %s180
      %s195 = sphi 0, %s181
      %s199 = sphi 0, %s199
      %s201 = sphi 0, %s199
      %s202 = sphi 0, %s201
      %s216 = sphi 0, %s202
      %s222 = sphi 0, %s224
      %s225 = sphi 0, %s222
      %s226 = sphi 0, %s225
      %s242 = sphi 0, %s226
    $region4: #{tpu_custom_call.1} parent=1 // loop_header_branch
      %21 = sbr.rel (%p19) target = $region8
    $region5: #{tpu_custom_call.1} parent=1 // loop_body
      %s23 = ssub.s32 %s18, 1
      %s24 = ssub.s32 %s18, 2
      %s25 = sadd.s32 %s18, 1
      %s26 = ssub.s32 %s18, %s25
      %p27 = scmp.eq.s32.totalorder %s26, 0
      %s29 = sadd.s32 %s28, 1
      %s30 = scalar_select %p27, %s28, %s29
      %p33 = pneg %p27
      %p34 = scmp.eq.s32.totalorder %s18, 1
      %p35 = por %p33, %p34
      %p36 = scmp.ne.s32.totalorder %s28, %s31
      %p37 = scmp.eq.s32.totalorder %s18, 0
      %p38 = por %p36, %p37
      %p39 = scmp.ne.s32.totalorder %s28, %s31
      %p40 = scmp.eq.s32.totalorder %s23, 1
      %p41 = por %p39, %p40
      %p42 = scmp.ne.s32.totalorder %s31, %s32
      %p43 = scmp.eq.s32.totalorder %s23, 0
      %p44 = por %p42, %p43
      %p45 = scmp.ne.s32.totalorder %s31, %s32
      %p46 = scmp.eq.s32.totalorder %s24, 1
      %p47 = por %p45, %p46
      %p49 = scmp.ne.s32.totalorder %s32, %s48
      %p50 = scmp.eq.s32.totalorder %s24, 0
      %p51 = por %p49, %p50
      %s53 = sadd.s32 %s52, 1
      %p56 = scmp.eq.s32.totalorder %s18, 1
      %p57 = scmp.ne.s32.totalorder %s52, %s54
      %p58 = scmp.eq.s32.totalorder %s18, 0
      %p59 = por %p57, %p58
      %p60 = scmp.ne.s32.totalorder %s52, %s54
      %p61 = scmp.eq.s32.totalorder %s23, 1
      %p62 = por %p60, %p61
      %p63 = scmp.ne.s32.totalorder %s54, %s55
      %p64 = scmp.eq.s32.totalorder %s23, 0
      %p65 = por %p63, %p64
      %p66 = scmp.ne.s32.totalorder %s54, %s55
      %p67 = scmp.eq.s32.totalorder %s24, 1
      %p68 = por %p66, %p67
      %p70 = scmp.ne.s32.totalorder %s55, %s69
      %p71 = scmp.eq.s32.totalorder %s24, 0
      %p72 = por %p70, %p71
      %s74 = sadd.s32 %s73, 1
      %p77 = scmp.eq.s32.totalorder %s18, 1
      %p78 = scmp.ne.s32.totalorder %s73, %s75
      %p79 = scmp.eq.s32.totalorder %s18, 0
      %p80 = por %p78, %p79
      %p81 = scmp.ne.s32.totalorder %s73, %s75
      %p82 = scmp.eq.s32.totalorder %s23, 1
      %p83 = por %p81, %p82
      %p84 = scmp.ne.s32.totalorder %s75, %s76
      %p85 = scmp.eq.s32.totalorder %s23, 0
      %p86 = por %p84, %p85
      %p87 = scmp.ne.s32.totalorder %s75, %s76
      %p88 = scmp.eq.s32.totalorder %s24, 1
      %p89 = por %p87, %p88
      %p91 = scmp.ne.s32.totalorder %s76, %s90
      %p92 = scmp.eq.s32.totalorder %s24, 0
      %p93 = por %p91, %p92
      %s95 = sadd.s32 %s94, 1
      %p98 = scmp.eq.s32.totalorder %s18, 1
      %p99 = scmp.ne.s32.totalorder %s94, %s96
      %p100 = scmp.eq.s32.totalorder %s18, 0
      %p101 = por %p99, %p100
      %p102 = scmp.ne.s32.totalorder %s94, %s96
      %p103 = scmp.eq.s32.totalorder %s23, 1
      %p104 = por %p102, %p103
      %p105 = scmp.ne.s32.totalorder %s96, %s97
      %p106 = scmp.eq.s32.totalorder %s23, 0
      %p107 = por %p105, %p106
      %p108 = scmp.ne.s32.totalorder %s96, %s97
      %p109 = scmp.eq.s32.totalorder %s24, 1
      %p110 = por %p108, %p109
      %p112 = scmp.ne.s32.totalorder %s97, %s111
      %p113 = scmp.eq.s32.totalorder %s24, 0
      %p114 = por %p112, %p113
      %s116 = sadd.s32 %s115, 1
      %p119 = scmp.eq.s32.totalorder %s18, 1
      %p120 = scmp.ne.s32.totalorder %s115, %s117
      %p121 = scmp.eq.s32.totalorder %s18, 0
      %p122 = por %p120, %p121
      %p123 = scmp.ne.s32.totalorder %s115, %s117
      %p124 = scmp.eq.s32.totalorder %s23, 1
      %p125 = por %p123, %p124
      %p126 = scmp.ne.s32.totalorder %s117, %s118
      %p127 = scmp.eq.s32.totalorder %s23, 0
      %p128 = por %p126, %p127
      %p129 = scmp.ne.s32.totalorder %s117, %s118
      %p130 = scmp.eq.s32.totalorder %s24, 1
      %p131 = por %p129, %p130
      %p133 = scmp.ne.s32.totalorder %s118, %s132
      %p134 = scmp.eq.s32.totalorder %s24, 0
      %p135 = por %p133, %p134
      %s137 = sadd.s32 %s136, 1
      %p140 = scmp.eq.s32.totalorder %s18, 1
      %p141 = scmp.ne.s32.totalorder %s136, %s138
      %p142 = scmp.eq.s32.totalorder %s18, 0
      %p143 = por %p141, %p142
      %p144 = scmp.ne.s32.totalorder %s136, %s138
      %p145 = scmp.eq.s32.totalorder %s23, 1
      %p146 = por %p144, %p145
      %p147 = scmp.ne.s32.totalorder %s138, %s139
      %p148 = scmp.eq.s32.totalorder %s23, 0
      %p149 = por %p147, %p148
      %p150 = scmp.ne.s32.totalorder %s138, %s139
      %p151 = scmp.eq.s32.totalorder %s24, 1
      %p152 = por %p150, %p151
      %p154 = scmp.ne.s32.totalorder %s139, %s153
      %p155 = scmp.eq.s32.totalorder %s24, 0
      %p156 = por %p154, %p155
      %s158 = sadd.s32 %s157, 1
      %p161 = scmp.eq.s32.totalorder %s18, 1
      %p162 = scmp.ne.s32.totalorder %s157, %s159
      %p163 = scmp.eq.s32.totalorder %s18, 0
      %p164 = por %p162, %p163
      %p165 = scmp.ne.s32.totalorder %s157, %s159
      %p166 = scmp.eq.s32.totalorder %s23, 1
      %p167 = por %p165, %p166
      %p168 = scmp.ne.s32.totalorder %s159, %s160
      %p169 = scmp.eq.s32.totalorder %s23, 0
      %p170 = por %p168, %p169
      %p171 = scmp.ne.s32.totalorder %s159, %s160
      %p172 = scmp.eq.s32.totalorder %s24, 1
      %p173 = por %p171, %p172
      %p175 = scmp.ne.s32.totalorder %s160, %s174
      %p176 = scmp.eq.s32.totalorder %s24, 0
      %p177 = por %p175, %p176
      %s179 = sadd.s32 %s178, 1
      %p182 = scmp.eq.s32.totalorder %s18, 1
      %p183 = scmp.ne.s32.totalorder %s178, %s180
      %p184 = scmp.eq.s32.totalorder %s18, 0
      %p185 = por %p183, %p184
      %p186 = scmp.ne.s32.totalorder %s178, %s180
      %p187 = scmp.eq.s32.totalorder %s23, 1
      %p188 = por %p186, %p187
      %p189 = scmp.ne.s32.totalorder %s180, %s181
      %p190 = scmp.eq.s32.totalorder %s23, 0
      %p191 = por %p189, %p190
      %p192 = scmp.ne.s32.totalorder %s180, %s181
      %p193 = scmp.eq.s32.totalorder %s24, 1
      %p194 = por %p192, %p193
      %p196 = scmp.ne.s32.totalorder %s181, %s195
      %p197 = scmp.eq.s32.totalorder %s24, 0
      %p198 = por %p196, %p197
      %s200 = sadd.s32 %s199, 1
      %p203 = scmp.eq.s32.totalorder %s18, 1
      %p204 = scmp.ne.s32.totalorder %s199, %s201
      %p205 = scmp.eq.s32.totalorder %s18, 0
      %p206 = por %p204, %p205
      %p207 = scmp.ne.s32.totalorder %s199, %s201
      %p208 = scmp.eq.s32.totalorder %s23, 1
      %p209 = por %p207, %p208
      %p210 = scmp.ne.s32.totalorder %s201, %s202
      %p211 = scmp.eq.s32.totalorder %s23, 0
      %p212 = por %p210, %p211
      %p213 = scmp.ne.s32.totalorder %s201, %s202
      %p214 = scmp.eq.s32.totalorder %s24, 1
      %p215 = por %p213, %p214
      %p217 = scmp.ne.s32.totalorder %s202, %s216
      %p218 = scmp.eq.s32.totalorder %s24, 0
      %p219 = por %p217, %p218
      %s220 = ssub.s32 %s18, %s25
      %p221 = scmp.eq.s32.totalorder %s220, 0
      %s223 = sadd.s32 %s222, 1
      %s224 = scalar_select %p221, %s222, %s223
      %p227 = pneg %p221
      %p228 = scmp.eq.s32.totalorder %s18, 1
      %p229 = por %p227, %p228
      %p230 = scmp.ne.s32.totalorder %s222, %s225
      %p231 = scmp.eq.s32.totalorder %s18, 0
      %p232 = por %p230, %p231
      %p233 = scmp.ne.s32.totalorder %s222, %s225
      %p234 = scmp.eq.s32.totalorder %s23, 1
      %p235 = por %p233, %p234
      %p236 = scmp.ne.s32.totalorder %s225, %s226
      %p237 = scmp.eq.s32.totalorder %s23, 0
      %p238 = por %p236, %p237
      %p239 = scmp.ne.s32.totalorder %s225, %s226
      %p240 = scmp.eq.s32.totalorder %s24, 1
      %p241 = por %p239, %p240
      %p243 = scmp.ne.s32.totalorder %s226, %s242
      %p244 = scmp.eq.s32.totalorder %s24, 0
      %p245 = por %p243, %p244
      %p246 = scmp.le.s32.totalorder 1, %s18
      %p247 = scmp.lt.s32.totalorder %s18, 3
      %p248 = pnand %p246, %p247
      %p249 = pneg %p248
      // Predicated region
      $region9: #{tpu_custom_call.1} parent=5 // pred_check
        _
      $region10: #{tpu_custom_call.1} parent=5 // pred_check_branch
        %251 = sbr.rel (%p248) target = $region12
      $region11: #{tpu_custom_call.1} parent=5 // pred_region
        %s252 = ssub.s32 %s18, 1
        // Predicated region
        $region13: #{tpu_custom_call.1} parent=11 // pred_check
          %p253 = pneg %p65
        $region14: #{tpu_custom_call.1} parent=11 // pred_check_branch
          %255 = sbr.rel (%p253) target = $region16
        $region15: #{tpu_custom_call.1} parent=11 // pred_region
          _
        $region16: #{tpu_custom_call.1} parent=11 // pred_fallthru
          _
        // Predicated region
        $region17: #{tpu_custom_call.1} parent=11 // pred_check
          %p256 = pneg %p86
        $region18: #{tpu_custom_call.1} parent=11 // pred_check_branch
          %258 = sbr.rel (%p256) target = $region20
        $region19: #{tpu_custom_call.1} parent=11 // pred_region
          _
        $region20: #{tpu_custom_call.1} parent=11 // pred_fallthru
          _
        // Predicated region
        $region21: #{tpu_custom_call.1} parent=11 // pred_check
          %p259 = pneg %p107
        $region22: #{tpu_custom_call.1} parent=11 // pred_check_branch
          %261 = sbr.rel (%p259) target = $region24
        $region23: #{tpu_custom_call.1} parent=11 // pred_region
          _
        $region24: #{tpu_custom_call.1} parent=11 // pred_fallthru
          _
        // Predicated region
        $region25: #{tpu_custom_call.1} parent=11 // pred_check
          %p262 = pneg %p128
        $region26: #{tpu_custom_call.1} parent=11 // pred_check_branch
          %264 = sbr.rel (%p262) target = $region28
        $region27: #{tpu_custom_call.1} parent=11 // pred_region
          _
        $region28: #{tpu_custom_call.1} parent=11 // pred_fallthru
          _
        // Predicated region
        $region29: #{tpu_custom_call.1} parent=11 // pred_check
          %p265 = pneg %p149
        $region30: #{tpu_custom_call.1} parent=11 // pred_check_branch
          %267 = sbr.rel (%p265) target = $region32
        $region31: #{tpu_custom_call.1} parent=11 // pred_region
          _
        $region32: #{tpu_custom_call.1} parent=11 // pred_fallthru
          _
        // Predicated region
        $region33: #{tpu_custom_call.1} parent=11 // pred_check
          %p268 = pneg %p170
        $region34: #{tpu_custom_call.1} parent=11 // pred_check_branch
          %270 = sbr.rel (%p268) target = $region36
        $region35: #{tpu_custom_call.1} parent=11 // pred_region
          _
        $region36: #{tpu_custom_call.1} parent=11 // pred_fallthru
          _
        // Predicated region
        $region37: #{tpu_custom_call.1} parent=11 // pred_check
          %p271 = pneg %p191
        $region38: #{tpu_custom_call.1} parent=11 // pred_check_branch
          %273 = sbr.rel (%p271) target = $region40
        $region39: #{tpu_custom_call.1} parent=11 // pred_region
          _
        $region40: #{tpu_custom_call.1} parent=11 // pred_fallthru
          _
        // Predicated region
        $region41: #{tpu_custom_call.1} parent=11 // pred_check
          %p274 = pneg %p212
        $region42: #{tpu_custom_call.1} parent=11 // pred_check_branch
          %276 = sbr.rel (%p274) target = $region44
        $region43: #{tpu_custom_call.1} parent=11 // pred_region
          _
        $region44: #{tpu_custom_call.1} parent=11 // pred_fallthru
          _
      $region12: #{tpu_custom_call.1} parent=5 // pred_fallthru
        _
      %p277 = scmp.lt.s32.totalorder %s18, 2
      // Predicated region
      $region45: #{tpu_custom_call.1} parent=5 // pred_check
        %p278 = pneg %p277
      $region46: #{tpu_custom_call.1} parent=5 // pred_check_branch
        %280 = sbr.rel (%p278) target = $region48
      $region47: #{tpu_custom_call.1} parent=5 // pred_region
        // Predicated region
        $region49: #{tpu_custom_call.1} parent=47 // pred_check
          %p281 = pneg %p38
        $region50: #{tpu_custom_call.1} parent=47 // pred_check_branch
          %283 = sbr.rel (%p281) target = $region52
        $region51: #{tpu_custom_call.1} parent=47 // pred_region
          %p284 = scmp.lt.s32.totalorder %s18, 1
          %s285 = scalar_select %p284, %s18, 1
          %s286 = smul.addr %s285, 8
          %s287 = smul.addr %s286, 8
          %s288 = scalar_lea.vmem %s0, %s287
        $region52: #{tpu_custom_call.1} parent=47 // pred_fallthru
          _
      $region48: #{tpu_custom_call.1} parent=5 // pred_fallthru
        _
      %p289 = scmp.le.s32.totalorder 1, %s18
      %p290 = scmp.lt.s32.totalorder %s18, 3
      %p291 = pnand %p289, %p290
      %p292 = pneg %p291
      // Predicated region
      $region53: #{tpu_custom_call.1} parent=5 // pred_check
        _
      $region54: #{tpu_custom_call.1} parent=5 // pred_check_branch
        %294 = sbr.rel (%p291) target = $region56
      $region55: #{tpu_custom_call.1} parent=5 // pred_region
        %s295 = ssub.s32 %s18, 1
        %p296 = scmp.lt.s32.totalorder %s23, 1
        %s297 = scalar_select %p296, %s23, 1
        %s298 = smul.addr %s297, 8
        %s299 = smul.addr %s298, 8
        %s300 = scalar_lea.vmem %s0, %s299
        %p301 = pneg %p44
        %p302 = pneg %p41
        %p303 = pneg %p65
        %p304 = pneg %p62
        %p305 = pneg %p86
        %p306 = pneg %p83
        %p307 = pneg %p107
        %p308 = pneg %p104
        %p309 = pneg %p128
        %p310 = pneg %p125
        %p311 = pneg %p149
        %p312 = pneg %p146
        %p313 = pneg %p170
        %p314 = pneg %p167
        %p315 = pneg %p191
        %p316 = pneg %p188
        %p317 = pneg %p212
        %p318 = pneg %p209
        %p319 = pneg %p238
        %p320 = pneg %p235
        %s321 = sand.u32 %s225, 1
        %s322 = scalar_lea.sflag [#allocation10], %s321
        %s323 = sand.u32 %s225, 1
        %s324 = scalar_lea.vmem [#allocation9], %s323
        %p325 = scmp.lt.s32.totalorder %s23, 1
        %s326 = scalar_select %p325, %s23, 1
        %s327 = smul.addr %s326, 8
        %s328 = smul.addr %s327, 8
        %s329 = scalar_lea.vmem %s0, %s328
        %v331 = vld [vmem:[%s329] sm:$0xff]
        %v332 = vld [vmem:[%s329 + $0x8] sm:$0xff]
        %v333 = vld [vmem:[%s329 + $0x10] sm:$0xff]
        %v334 = vld [vmem:[%s329 + $0x18] sm:$0xff]
        %v335 = vld [vmem:[%s329 + $0x20] sm:$0xff]
        %v336 = vld [vmem:[%s329 + $0x28] sm:$0xff]
        %v337 = vld [vmem:[%s329 + $0x30] sm:$0xff]
        %v338 = vld [vmem:[%s329 + $0x38] sm:$0xf]
        %v339 = vld [vmem:[%s1] sm:$0x1]
        %341 = vset.pattern.permute.xlu0 0
        %342 = vperm.xlu0 %341, %v331
        %v343 = vpop.permute.xlu0 %342
        %346 = vset.pattern.permute.xlu0 0
        %347 = vperm.xlu0 %346, %v332
        %v348 = vpop.permute.xlu0 %347
        %351 = vset.pattern.permute.xlu0 0
        %352 = vperm.xlu0 %351, %v333
        %v353 = vpop.permute.xlu0 %352
        %356 = vset.pattern.permute.xlu0 0
        %357 = vperm.xlu0 %356, %v334
        %v358 = vpop.permute.xlu0 %357
        %361 = vset.pattern.permute.xlu0 0
        %362 = vperm.xlu0 %361, %v335
        %v363 = vpop.permute.xlu0 %362
        %366 = vset.pattern.permute.xlu0 0
        %367 = vperm.xlu0 %366, %v336
        %v368 = vpop.permute.xlu0 %367
        %371 = vset.pattern.permute.xlu0 0
        %372 = vperm.xlu0 %371, %v337
        %v373 = vpop.permute.xlu0 %372
        %376 = vset.pattern.permute.xlu0 0
        %377 = vperm.xlu0 %376, %v338
        %v378 = vpop.permute.xlu0 %377
        %v380 = vperm.slane %v339, 0
        %v381 = vmul.f32 %v343, %v380
        %v382 = vmul.f32 %v348, %v380
        %v383 = vmul.f32 %v353, %v380
        %v384 = vmul.f32 %v358, %v380
        %v385 = vmul.f32 %v363, %v380
        %v386 = vmul.f32 %v368, %v380
        %v387 = vmul.f32 %v373, %v380
        %v388 = vmul.f32 %v378, %v380
        %v389 = vld [vmem:[%s329 + $0x1] sm:$0xff]
        %v390 = vld [vmem:[%s329 + $0x9] sm:$0xff]
        %v391 = vld [vmem:[%s329 + $0x11] sm:$0xff]
        %v392 = vld [vmem:[%s329 + $0x19] sm:$0xff]
        %v393 = vld [vmem:[%s329 + $0x21] sm:$0xff]
        %v394 = vld [vmem:[%s329 + $0x29] sm:$0xff]
        %v395 = vld [vmem:[%s329 + $0x31] sm:$0xff]
        %v396 = vld [vmem:[%s329 + $0x39] sm:$0xf]
        %v397 = vld [vmem:[%s1 + $0x1] sm:$0x1]
        %399 = vset.pattern.permute.xlu0 0
        %400 = vperm.xlu0 %399, %v389
        %v401 = vpop.permute.xlu0 %400
        %404 = vset.pattern.permute.xlu0 0
        %405 = vperm.xlu0 %404, %v390
        %v406 = vpop.permute.xlu0 %405
        %409 = vset.pattern.permute.xlu0 0
        %410 = vperm.xlu0 %409, %v391
        %v411 = vpop.permute.xlu0 %410
        %414 = vset.pattern.permute.xlu0 0
        %415 = vperm.xlu0 %414, %v392
        %v416 = vpop.permute.xlu0 %415
        %419 = vset.pattern.permute.xlu0 0
        %420 = vperm.xlu0 %419, %v393
        %v421 = vpop.permute.xlu0 %420
        %424 = vset.pattern.permute.xlu0 0
        %425 = vperm.xlu0 %424, %v394
        %v426 = vpop.permute.xlu0 %425
        %429 = vset.pattern.permute.xlu0 0
        %430 = vperm.xlu0 %429, %v395
        %v431 = vpop.permute.xlu0 %430
        %434 = vset.pattern.permute.xlu0 0
        %435 = vperm.xlu0 %434, %v396
        %v436 = vpop.permute.xlu0 %435
        %v438 = vperm.slane %v397, 0
        %v439 = vmul.f32 %v401, %v438
        %v440 = vmul.f32 %v406, %v438
        %v441 = vmul.f32 %v411, %v438
        %v442 = vmul.f32 %v416, %v438
        %v443 = vmul.f32 %v421, %v438
        %v444 = vmul.f32 %v426, %v438
        %v445 = vmul.f32 %v431, %v438
        %v446 = vmul.f32 %v436, %v438
        %v447 = vadd.f32 %v381, %v439
        %v448 = vadd.f32 %v382, %v440
        %v449 = vadd.f32 %v383, %v441
        %v450 = vadd.f32 %v384, %v442
        %v451 = vadd.f32 %v385, %v443
        %v452 = vadd.f32 %v386, %v444
        %v453 = vadd.f32 %v387, %v445
        %v454 = vadd.f32 %v388, %v446
        %v455 = vld [vmem:[%s329 + $0x2] sm:$0xff]
        %v456 = vld [vmem:[%s329 + $0xa] sm:$0xff]
        %v457 = vld [vmem:[%s329 + $0x12] sm:$0xff]
        %v458 = vld [vmem:[%s329 + $0x1a] sm:$0xff]
        %v459 = vld [vmem:[%s329 + $0x22] sm:$0xff]
        %v460 = vld [vmem:[%s329 + $0x2a] sm:$0xff]
        %v461 = vld [vmem:[%s329 + $0x32] sm:$0xff]
        %v462 = vld [vmem:[%s329 + $0x3a] sm:$0xf]
        %v463 = vld [vmem:[%s1 + $0x2] sm:$0x1]
        %465 = vset.pattern.permute.xlu0 0
        %466 = vperm.xlu0 %465, %v455
        %v467 = vpop.permute.xlu0 %466
        %470 = vset.pattern.permute.xlu0 0
        %471 = vperm.xlu0 %470, %v456
        %v472 = vpop.permute.xlu0 %471
        %475 = vset.pattern.permute.xlu0 0
        %476 = vperm.xlu0 %475, %v457
        %v477 = vpop.permute.xlu0 %476
        %480 = vset.pattern.permute.xlu0 0
        %481 = vperm.xlu0 %480, %v458
        %v482 = vpop.permute.xlu0 %481
        %485 = vset.pattern.permute.xlu0 0
        %486 = vperm.xlu0 %485, %v459
        %v487 = vpop.permute.xlu0 %486
        %490 = vset.pattern.permute.xlu0 0
        %491 = vperm.xlu0 %490, %v460
        %v492 = vpop.permute.xlu0 %491
        %495 = vset.pattern.permute.xlu0 0
        %496 = vperm.xlu0 %495, %v461
        %v497 = vpop.permute.xlu0 %496
        %500 = vset.pattern.permute.xlu0 0
        %501 = vperm.xlu0 %500, %v462
        %v502 = vpop.permute.xlu0 %501
        %v504 = vperm.slane %v463, 0
        %v505 = vmul.f32 %v467, %v504
        %v506 = vmul.f32 %v472, %v504
        %v507 = vmul.f32 %v477, %v504
        %v508 = vmul.f32 %v482, %v504
        %v509 = vmul.f32 %v487, %v504
        %v510 = vmul.f32 %v492, %v504
        %v511 = vmul.f32 %v497, %v504
        %v512 = vmul.f32 %v502, %v504
        %v513 = vadd.f32 %v447, %v505
        %v514 = vadd.f32 %v448, %v506
        %v515 = vadd.f32 %v449, %v507
        %v516 = vadd.f32 %v450, %v508
        %v517 = vadd.f32 %v451, %v509
        %v518 = vadd.f32 %v452, %v510
        %v519 = vadd.f32 %v453, %v511
        %v520 = vadd.f32 %v454, %v512
        %v521 = vld [vmem:[%s329 + $0x3] sm:$0xff]
        %v522 = vld [vmem:[%s329 + $0xb] sm:$0xff]
        %v523 = vld [vmem:[%s329 + $0x13] sm:$0xff]
        %v524 = vld [vmem:[%s329 + $0x1b] sm:$0xff]
        %v525 = vld [vmem:[%s329 + $0x23] sm:$0xff]
        %v526 = vld [vmem:[%s329 + $0x2b] sm:$0xff]
        %v527 = vld [vmem:[%s329 + $0x33] sm:$0xff]
        %v528 = vld [vmem:[%s329 + $0x3b] sm:$0xf]
        %v529 = vld [vmem:[%s1 + $0x3] sm:$0x1]
        %531 = vset.pattern.permute.xlu0 0
        %532 = vperm.xlu0 %531, %v521
        %v533 = vpop.permute.xlu0 %532
        %536 = vset.pattern.permute.xlu0 0
        %537 = vperm.xlu0 %536, %v522
        %v538 = vpop.permute.xlu0 %537
        %541 = vset.pattern.permute.xlu0 0
        %542 = vperm.xlu0 %541, %v523
        %v543 = vpop.permute.xlu0 %542
        %546 = vset.pattern.permute.xlu0 0
        %547 = vperm.xlu0 %546, %v524
        %v548 = vpop.permute.xlu0 %547
        %551 = vset.pattern.permute.xlu0 0
        %552 = vperm.xlu0 %551, %v525
        %v553 = vpop.permute.xlu0 %552
        %556 = vset.pattern.permute.xlu0 0
        %557 = vperm.xlu0 %556, %v526
        %v558 = vpop.permute.xlu0 %557
        %561 = vset.pattern.permute.xlu0 0
        %562 = vperm.xlu0 %561, %v527
        %v563 = vpop.permute.xlu0 %562
        %566 = vset.pattern.permute.xlu0 0
        %567 = vperm.xlu0 %566, %v528
        %v568 = vpop.permute.xlu0 %567
        %v570 = vperm.slane %v529, 0
        %v571 = vmul.f32 %v533, %v570
        %v572 = vmul.f32 %v538, %v570
        %v573 = vmul.f32 %v543, %v570
        %v574 = vmul.f32 %v548, %v570
        %v575 = vmul.f32 %v553, %v570
        %v576 = vmul.f32 %v558, %v570
        %v577 = vmul.f32 %v563, %v570
        %v578 = vmul.f32 %v568, %v570
        %v579 = vadd.f32 %v513, %v571
        %v580 = vadd.f32 %v514, %v572
        %v581 = vadd.f32 %v515, %v573
        %v582 = vadd.f32 %v516, %v574
        %v583 = vadd.f32 %v517, %v575
        %v584 = vadd.f32 %v518, %v576
        %v585 = vadd.f32 %v519, %v577
        %v586 = vadd.f32 %v520, %v578
        %v587 = vld [vmem:[%s329 + $0x4] sm:$0xff]
        %v588 = vld [vmem:[%s329 + $0xc] sm:$0xff]
        %v589 = vld [vmem:[%s329 + $0x14] sm:$0xff]
        %v590 = vld [vmem:[%s329 + $0x1c] sm:$0xff]
        %v591 = vld [vmem:[%s329 + $0x24] sm:$0xff]
        %v592 = vld [vmem:[%s329 + $0x2c] sm:$0xff]
        %v593 = vld [vmem:[%s329 + $0x34] sm:$0xff]
        %v594 = vld [vmem:[%s329 + $0x3c] sm:$0xf]
        %v595 = vld [vmem:[%s1 + $0x4] sm:$0x1]
        %597 = vset.pattern.permute.xlu0 0
        %598 = vperm.xlu0 %597, %v587
        %v599 = vpop.permute.xlu0 %598
        %602 = vset.pattern.permute.xlu0 0
        %603 = vperm.xlu0 %602, %v588
        %v604 = vpop.permute.xlu0 %603
        %607 = vset.pattern.permute.xlu0 0
        %608 = vperm.xlu0 %607, %v589
        %v609 = vpop.permute.xlu0 %608
        %612 = vset.pattern.permute.xlu0 0
        %613 = vperm.xlu0 %612, %v590
        %v614 = vpop.permute.xlu0 %613
        %617 = vset.pattern.permute.xlu0 0
        %618 = vperm.xlu0 %617, %v591
        %v619 = vpop.permute.xlu0 %618
        %622 = vset.pattern.permute.xlu0 0
        %623 = vperm.xlu0 %622, %v592
        %v624 = vpop.permute.xlu0 %623
        %627 = vset.pattern.permute.xlu0 0
        %628 = vperm.xlu0 %627, %v593
        %v629 = vpop.permute.xlu0 %628
        %632 = vset.pattern.permute.xlu0 0
        %633 = vperm.xlu0 %632, %v594
        %v634 = vpop.permute.xlu0 %633
        %v636 = vperm.slane %v595, 0
        %v637 = vmul.f32 %v599, %v636
        %v638 = vmul.f32 %v604, %v636
        %v639 = vmul.f32 %v609, %v636
        %v640 = vmul.f32 %v614, %v636
        %v641 = vmul.f32 %v619, %v636
        %v642 = vmul.f32 %v624, %v636
        %v643 = vmul.f32 %v629, %v636
        %v644 = vmul.f32 %v634, %v636
        %v645 = vadd.f32 %v579, %v637
        %v646 = vadd.f32 %v580, %v638
        %v647 = vadd.f32 %v581, %v639
        %v648 = vadd.f32 %v582, %v640
        %v649 = vadd.f32 %v583, %v641
        %v650 = vadd.f32 %v584, %v642
        %v651 = vadd.f32 %v585, %v643
        %v652 = vadd.f32 %v586, %v644
        %v653 = vld [vmem:[%s2] sm:$0x1]
        %v655 = vperm.slane %v653, 0
        %v657 = vadd.f32 %v645, %v655
        %v658 = vadd.f32 %v646, %v655
        %v659 = vadd.f32 %v647, %v655
        %v660 = vadd.f32 %v648, %v655
        %v661 = vadd.f32 %v649, %v655
        %v662 = vadd.f32 %v650, %v655
        %v663 = vadd.f32 %v651, %v655
        %v664 = vadd.f32 %v652, %v655
        %v665 = vmax.f32 %v657, 0.0
        %v666 = vmax.f32 %v658, 0.0
        %v667 = vmax.f32 %v659, 0.0
        %v668 = vmax.f32 %v660, 0.0
        %v669 = vmax.f32 %v661, 0.0
        %v670 = vmax.f32 %v662, 0.0
        %v671 = vmax.f32 %v663, 0.0
        %v672 = vmax.f32 %v664, 0.0
        %vm673 = vcmask 130048
        %674 = vst.msk [vmem:[#allocation2] sm:$0xff] %vm673, %v665
        %675 = vst.msk [vmem:[#allocation2 + $0x8] sm:$0xff] %vm673, %v666
        %676 = vst.msk [vmem:[#allocation2 + $0x10] sm:$0xff] %vm673, %v667
        %677 = vst.msk [vmem:[#allocation2 + $0x18] sm:$0xff] %vm673, %v668
        %678 = vst.msk [vmem:[#allocation2 + $0x20] sm:$0xff] %vm673, %v669
        %679 = vst.msk [vmem:[#allocation2 + $0x28] sm:$0xff] %vm673, %v670
        %680 = vst.msk [vmem:[#allocation2 + $0x30] sm:$0xff] %vm673, %v671
        %vm681 = vcmask 125952
        %682 = vst.msk [vmem:[#allocation2 + $0x38] sm:$0xf] %vm681, %v672
        %v683 = vld [vmem:[#allocation2] ss:$2 sm:$0xff]
        %s684 = scalar_lea.vmem [#allocation2], 16
        %v685 = vld [vmem:[%s684] ss:$2 sm:$0xff]
        %s686 = scalar_lea.vmem [#allocation2], 32
        %v687 = vld [vmem:[%s686] ss:$2 sm:$0xff]
        %s688 = scalar_lea.vmem [#allocation2], 48
        %v689 = vld [vmem:[%s688] ss:$2 sm:$0x3f]
        %s690 = scalar_lea.vmem [#allocation2], 1
        %v691 = vld [vmem:[%s690] ss:$2 sm:$0xff]
        %s692 = scalar_lea.vmem [#allocation2], 17
        %v693 = vld [vmem:[%s692] ss:$2 sm:$0xff]
        %s694 = scalar_lea.vmem [#allocation2], 33
        %v695 = vld [vmem:[%s694] ss:$2 sm:$0xff]
        %s696 = scalar_lea.vmem [#allocation2], 49
        %v697 = vld [vmem:[%s696] ss:$2 sm:$0x3f]
        %v698 = vmax.f32 %v683, %v691
        %v699 = vmax.f32 %v685, %v693
        %v700 = vmax.f32 %v687, %v695
        %v701 = vmax.f32 %v689, %v697
        %702 = vst.msk [vmem:[#allocation3] sm:$0xff] %vm673, %v698
        %703 = vst.msk [vmem:[#allocation3 + $0x8] sm:$0xff] %vm673, %v699
        %704 = vst.msk [vmem:[#allocation3 + $0x10] sm:$0xff] %vm673, %v700
        %vm705 = vcmask 128000
        %706 = vst.msk [vmem:[#allocation3 + $0x18] sm:$0x3f] %vm705, %v701
        %v707 = vld [vmem:[#allocation3] sm:$0xff]
        %v708 = vld [vmem:[#allocation3 + $0x8] sm:$0xff]
        %v709 = vld [vmem:[#allocation3 + $0x10] sm:$0xff]
        %v710 = vld [vmem:[#allocation3 + $0x18] sm:$0x3]
        %711 = vst.msk [vmem:[#allocation4] sm:$0xff] %vm673, %v707
        %712 = vst.msk [vmem:[#allocation4 + $0x8] sm:$0xff] %vm673, %v708
        %713 = vst.msk [vmem:[#allocation4 + $0x10] sm:$0xff] %vm673, %v709
        %vm714 = vcmask 123904
        %715 = vst.msk [vmem:[#allocation4 + $0x18] sm:$0x3] %vm714, %v710
        %v716 = vld [vmem:[#allocation3 + $0x1] sm:$0xff]
        %v717 = vld [vmem:[#allocation3 + $0x9] sm:$0xff]
        %v718 = vld [vmem:[#allocation3 + $0x11] sm:$0xff]
        %v719 = vld [vmem:[#allocation3 + $0x19] sm:$0x3]
        %724 = vrot.lane.b32.xlu0 %v716, 16
        %v725 = vpop.permute.xlu0 %724
        %726 = vrot.lane.b32.xlu0 %v717, 16
        %v727 = vpop.permute.xlu0 %726
        %728 = vrot.lane.b32.xlu0 %v718, 16
        %v729 = vpop.permute.xlu0 %728
        %730 = vrot.lane.b32.xlu0 %v719, 16
        %v731 = vpop.permute.xlu0 %730
        %vm736 = vcmask 261248
        %737 = vst.msk [vmem:[#allocation4] sm:$0xff] %vm736, %v725
        %738 = vst.msk [vmem:[#allocation4 + $0x8] sm:$0xff] %vm736, %v727
        %739 = vst.msk [vmem:[#allocation4 + $0x10] sm:$0xff] %vm736, %v729
        %vm740 = vcmask 255104
        %741 = vst.msk [vmem:[#allocation4 + $0x18] sm:$0x3] %vm740, %v731
        %v742 = vld [vmem:[#allocation3 + $0x2] sm:$0xff]
        %v743 = vld [vmem:[#allocation3 + $0xa] sm:$0xff]
        %v744 = vld [vmem:[#allocation3 + $0x12] sm:$0xff]
        %v745 = vld [vmem:[#allocation3 + $0x1a] sm:$0x3]
        %750 = vrot.lane.b32.xlu0 %v742, 32
        %v751 = vpop.permute.xlu0 %750
        %752 = vrot.lane.b32.xlu0 %v743, 32
        %v753 = vpop.permute.xlu0 %752
        %754 = vrot.lane.b32.xlu0 %v744, 32
        %v755 = vpop.permute.xlu0 %754
        %756 = vrot.lane.b32.xlu0 %v745, 32
        %v757 = vpop.permute.xlu0 %756
        %vm762 = vcmask 392448
        %763 = vst.msk [vmem:[#allocation4] sm:$0xff] %vm762, %v751
        %764 = vst.msk [vmem:[#allocation4 + $0x8] sm:$0xff] %vm762, %v753
        %765 = vst.msk [vmem:[#allocation4 + $0x10] sm:$0xff] %vm762, %v755
        %vm766 = vcmask 386304
        %767 = vst.msk [vmem:[#allocation4 + $0x18] sm:$0x3] %vm766, %v757
        %v768 = vld [vmem:[#allocation3 + $0x3] sm:$0xff]
        %v769 = vld [vmem:[#allocation3 + $0xb] sm:$0xff]
        %v770 = vld [vmem:[#allocation3 + $0x13] sm:$0xff]
        %v771 = vld [vmem:[#allocation3 + $0x1b] sm:$0x3]
        %776 = vrot.lane.b32.xlu0 %v768, 48
        %v777 = vpop.permute.xlu0 %776
        %778 = vrot.lane.b32.xlu0 %v769, 48
        %v779 = vpop.permute.xlu0 %778
        %780 = vrot.lane.b32.xlu0 %v770, 48
        %v781 = vpop.permute.xlu0 %780
        %782 = vrot.lane.b32.xlu0 %v771, 48
        %v783 = vpop.permute.xlu0 %782
        %vm788 = vcmask 523648
        %789 = vst.msk [vmem:[#allocation4] sm:$0xff] %vm788, %v777
        %790 = vst.msk [vmem:[#allocation4 + $0x8] sm:$0xff] %vm788, %v779
        %791 = vst.msk [vmem:[#allocation4 + $0x10] sm:$0xff] %vm788, %v781
        %vm792 = vcmask 517504
        %793 = vst.msk [vmem:[#allocation4 + $0x18] sm:$0x3] %vm792, %v783
        %v794 = vld [vmem:[#allocation3 + $0x4] sm:$0xff]
        %v795 = vld [vmem:[#allocation3 + $0xc] sm:$0xff]
        %v796 = vld [vmem:[#allocation3 + $0x14] sm:$0xff]
        %v797 = vld [vmem:[#allocation3 + $0x1c] sm:$0x3]
        %802 = vrot.lane.b32.xlu0 %v794, 64
        %v803 = vpop.permute.xlu0 %802
        %804 = vrot.lane.b32.xlu0 %v795, 64
        %v805 = vpop.permute.xlu0 %804
        %806 = vrot.lane.b32.xlu0 %v796, 64
        %v807 = vpop.permute.xlu0 %806
        %808 = vrot.lane.b32.xlu0 %v797, 64
        %v809 = vpop.permute.xlu0 %808
        %vm814 = vcmask 654848
        %815 = vst.msk [vmem:[#allocation4] sm:$0xff] %vm814, %v803
        %816 = vst.msk [vmem:[#allocation4 + $0x8] sm:$0xff] %vm814, %v805
        %817 = vst.msk [vmem:[#allocation4 + $0x10] sm:$0xff] %vm814, %v807
        %vm818 = vcmask 648704
        %819 = vst.msk [vmem:[#allocation4 + $0x18] sm:$0x3] %vm818, %v809
        %v820 = vld [vmem:[#allocation4] sm:$0xff]
        %v821 = vld [vmem:[#allocation4 + $0x8] sm:$0xff]
        %v822 = vld [vmem:[#allocation4 + $0x10] sm:$0xff]
        %v823 = vld [vmem:[#allocation4 + $0x18] sm:$0x3]
        %v824 = vpack.c.bf16 %v821, %v820
        %v825 = vpack.c.bf16 %v823, %v822
        %v826 = vld [vmem:[%s3] sm:$0xf]
        %v827 = vld [vmem:[%s3 + $0x4] sm:$0xf]
        %v828 = vld [vmem:[%s3 + $0x8] sm:$0xf]
        %v829 = vld [vmem:[%s3 + $0xc] sm:$0xf]
        %v830 = vld [vmem:[%s3 + $0x10] sm:$0xf]
        %v831 = vld [vmem:[%s3 + $0x14] sm:$0xf]
        %v832 = vld [vmem:[%s3 + $0x18] sm:$0xf]
        %v833 = vld [vmem:[%s3 + $0x1c] sm:$0xf]
        %v834 = vld [vmem:[%s3 + $0x20] sm:$0xf]
        %v835 = vld [vmem:[%s3 + $0x24] sm:$0xf]
        %v836 = vld [vmem:[%s4] sm:$0x1]
        %v838 = vperm.slane %v836, 0
        %v850 = vunpack.c.l.b16 %v826
        %v851 = vunpack.c.l.b16 %v827
        %v852 = vunpack.c.l.b16 %v828
        %v853 = vunpack.c.l.b16 %v829
        %v854 = vunpack.c.l.b16 %v830
        %v855 = vunpack.c.l.b16 %v831
        %v856 = vunpack.c.l.b16 %v832
        %v857 = vunpack.c.l.b16 %v833
        %v858 = vunpack.c.l.b16 %v834
        %v859 = vunpack.c.l.b16 %v835
        %v860 = vpack.c.b16 %v851, %v850
        %v861 = vpack.c.b16 %v853, %v852
        %v862 = vpack.c.b16 %v855, %v854
        %v863 = vpack.c.b16 %v857, %v856
        %v864 = vpack.c.b16 %v859, %v858
        %vm870 = vcmask 654336
        %v872 = vsel %vm870, %v824, 0
        %v875 = vsel %vm870, %v825, 0
        %877 = vmatpush.bf16.msra.mxu0 0
        %878 = vmatpush.bf16.msra.mxu0 0
        %879 = vmatpush.bf16.msra.mxu0 0
        %880 = vmatpush.bf16.msra.mxu0 %v864
        %881 = vmatpush.bf16.msra.mxu0 %v863
        %882 = vmatpush.bf16.msra.mxu0 %v862
        %883 = vmatpush.bf16.msra.mxu0 %v861
        %884 = vmatpush.bf16.msra.mxu0 %v860
        %885 = vmatmul.bf16.gmra.mxu0 %v872
        %v886 = vpop.f32.mrf.mxu0
        %v887 = vadd.f32 %v838, %v886
        %v888 = vpop.f32.mrf.mxu0
        %v889 = vadd.f32 %v838, %v888
        %890 = vmatmul.bf16.gmra.mxu0 %v875
        %v891 = vpop.f32.mrf.mxu0
        %v892 = vadd.f32 %v838, %v891
        %v893 = vpop.f32.mrf.mxu0
        %v894 = vadd.f32 %v838, %v893
        %895 = vdwg.mxu0
        %v896 = vmax.f32 %v887, 0.0
        %v897 = vmax.f32 %v889, 0.0
        %v898 = vmax.f32 %v892, 0.0
        %v899 = vmax.f32 %v894, 0.0
        %vm900 = vcmask 261120
        %901 = vst.msk [vmem:[#allocation5] sm:$0xff] %vm900, %v896
        %902 = vst.msk [vmem:[#allocation5 + $0x8] sm:$0xff] %vm900, %v897
        %903 = vst.msk [vmem:[#allocation5 + $0x10] sm:$0xff] %vm900, %v898
        %vm904 = vcmask 254976
        %905 = vst.msk [vmem:[#allocation5 + $0x18] sm:$0x3] %vm904, %v899
        %v906 = vld [vmem:[#allocation5] ss:$2 sm:$0xff]
        %s907 = scalar_lea.vmem [#allocation5], 16
        %v908 = vld [vmem:[%s907] ss:$2 sm:$0x1f]
        %s909 = scalar_lea.vmem [#allocation5], 1
        %v910 = vld [vmem:[%s909] ss:$2 sm:$0xff]
        %s911 = scalar_lea.vmem [#allocation5], 17
        %v912 = vld [vmem:[%s911] ss:$2 sm:$0x1f]
        %v913 = vmax.f32 %v906, %v910
        %v914 = vmax.f32 %v908, %v912
        %915 = vst.msk [vmem:[#allocation6] sm:$0xff] %vm900, %v913
        %vm916 = vcmask 258048
        %917 = vst.msk [vmem:[#allocation6 + $0x8] sm:$0x1f] %vm916, %v914
        %v918 = vld [vmem:[#allocation6] sm:$0xff]
        %v919 = vld [vmem:[#allocation6 + $0x8] sm:$0x1]
        %920 = vst.msk [vmem:[#allocation7] sm:$0xff] %vm900, %v918
        %vm921 = vcmask 253952
        %922 = vst.msk [vmem:[#allocation7 + $0x10] sm:$0x1] %vm921, %v919
        %v923 = vld [vmem:[#allocation6 + $0x1] sm:$0xff]
        %v924 = vld [vmem:[#allocation6 + $0x9] sm:$0x1]
        %927 = vrot.lane.b32.xlu0 %v923, 32
        %v928 = vpop.permute.xlu0 %927
        %929 = vrot.lane.b32.xlu0 %v924, 32
        %v930 = vpop.permute.xlu0 %929
        %vm933 = vcmask 523520
        %934 = vst.msk [vmem:[#allocation7] sm:$0xff] %vm933, %v928
        %vm935 = vcmask 516352
        %936 = vst.msk [vmem:[#allocation7 + $0x10] sm:$0x1] %vm935, %v930
        %v937 = vld [vmem:[#allocation6 + $0x2] sm:$0xff]
        %v938 = vld [vmem:[#allocation6 + $0xa] sm:$0x1]
        %941 = vrot.lane.b32.xlu0 %v937, 64
        %v942 = vpop.permute.xlu0 %941
        %943 = vrot.lane.b32.xlu0 %v938, 64
        %v944 = vpop.permute.xlu0 %943
        %vm947 = vcmask 785920
        %948 = vst.msk [vmem:[#allocation7] sm:$0xff] %vm947, %v942
        %vm949 = vcmask 778752
        %950 = vst.msk [vmem:[#allocation7 + $0x10] sm:$0x1] %vm949, %v944
        %v951 = vld [vmem:[#allocation6 + $0x3] sm:$0xff]
        %v952 = vld [vmem:[#allocation6 + $0xb] sm:$0x1]
        %955 = vrot.lane.b32.xlu0 %v951, 96
        %v956 = vpop.permute.xlu0 %955
        %957 = vrot.lane.b32.xlu0 %v952, 96
        %v958 = vpop.permute.xlu0 %957
        %vm961 = vcmask 1048320
        %962 = vst.msk [vmem:[#allocation7] sm:$0xff] %vm961, %v956
        %vm963 = vcmask 1041152
        %964 = vst.msk [vmem:[#allocation7 + $0x10] sm:$0x1] %vm963, %v958
        %v965 = vld [vmem:[#allocation6 + $0x4] sm:$0xff]
        %v966 = vld [vmem:[#allocation6 + $0xc] sm:$0x1]
        %967 = vst.msk [vmem:[#allocation7 + $0x8] sm:$0xff] %vm900, %v965
        %968 = vst.msk [vmem:[#allocation7 + $0x18] sm:$0x1] %vm921, %v966
        %v969 = vld [vmem:[#allocation7] sm:$0xff]
        %v970 = vld [vmem:[#allocation7 + $0x8] sm:$0xff]
        %v971 = vld [vmem:[#allocation7 + $0x10] sm:$0x1]
        %v972 = vld [vmem:[#allocation7 + $0x18] sm:$0x1]
        %v973 = vpack.c.bf16 %v971, %v969
        %v974 = vpack.c.bf16 %v972, %v970
        %v975 = vld [vmem:[%s5] sm:$0xf]
        %v976 = vld [vmem:[%s5 + $0x4] sm:$0xf]
        %v977 = vld [vmem:[%s5 + $0x8] sm:$0xf]
        %v978 = vld [vmem:[%s5 + $0xc] sm:$0xf]
        %v979 = vld [vmem:[%s5 + $0x10] sm:$0xf]
        %v980 = vld [vmem:[%s5 + $0x14] sm:$0xf]
        %v981 = vld [vmem:[%s5 + $0x18] sm:$0xf]
        %v982 = vld [vmem:[%s5 + $0x1c] sm:$0xf]
        %v983 = vld [vmem:[%s5 + $0x20] sm:$0xf]
        %v984 = vld [vmem:[%s5 + $0x24] sm:$0xf]
        %v985 = vld [vmem:[%s5 + $0x28] sm:$0xf]
        %v986 = vld [vmem:[%s5 + $0x2c] sm:$0xf]
        %v987 = vld [vmem:[%s5 + $0x30] sm:$0xf]
        %v988 = vld [vmem:[%s5 + $0x34] sm:$0xf]
        %v989 = vld [vmem:[%s5 + $0x38] sm:$0xf]
        %v990 = vld [vmem:[%s5 + $0x3c] sm:$0xf]
        %v991 = vld [vmem:[%s5 + $0x40] sm:$0xf]
        %v992 = vld [vmem:[%s5 + $0x44] sm:$0xf]
        %v993 = vld [vmem:[%s5 + $0x48] sm:$0xf]
        %v994 = vld [vmem:[%s5 + $0x4c] sm:$0xf]
        %v995 = vld [vmem:[%s6] sm:$0x1]
        %v997 = vperm.slane %v995, 0
        %v1019 = vunpack.c.l.b16 %v975
        %v1020 = vunpack.c.l.b16 %v976
        %v1021 = vunpack.c.l.b16 %v977
        %v1022 = vunpack.c.l.b16 %v978
        %v1023 = vunpack.c.l.b16 %v979
        %v1024 = vunpack.c.l.b16 %v980
        %v1025 = vunpack.c.l.b16 %v981
        %v1026 = vunpack.c.l.b16 %v982
        %v1027 = vunpack.c.l.b16 %v983
        %v1028 = vunpack.c.l.b16 %v984
        %v1029 = vunpack.c.l.b16 %v985
        %v1030 = vunpack.c.l.b16 %v986
        %v1031 = vunpack.c.l.b16 %v987
        %v1032 = vunpack.c.l.b16 %v988
        %v1033 = vunpack.c.l.b16 %v989
        %v1034 = vunpack.c.l.b16 %v990
        %v1035 = vunpack.c.l.b16 %v991
        %v1036 = vunpack.c.l.b16 %v992
        %v1037 = vunpack.c.l.b16 %v993
        %v1038 = vunpack.c.l.b16 %v994
        %v1039 = vpack.c.b16 %v1020, %v1019
        %v1040 = vpack.c.b16 %v1022, %v1021
        %v1041 = vpack.c.b16 %v1024, %v1023
        %v1042 = vpack.c.b16 %v1026, %v1025
        %v1043 = vpack.c.b16 %v1028, %v1027
        %v1044 = vpack.c.b16 %v1030, %v1029
        %v1045 = vpack.c.b16 %v1032, %v1031
        %v1046 = vpack.c.b16 %v1034, %v1033
        %v1047 = vpack.c.b16 %v1036, %v1035
        %v1048 = vpack.c.b16 %v1038, %v1037
        %v1060 = vsel %vm900, %v974, 0
        %1062 = vmatpush.bf16.msra.mxu0 %v1046
        %1063 = vmatpush.bf16.msra.mxu0 %v1045
        %1064 = vmatpush.bf16.msra.mxu0 %v1044
        %1065 = vmatpush.bf16.msra.mxu0 %v1043
        %1066 = vmatpush.bf16.msra.mxu0 %v1042
        %1067 = vmatpush.bf16.msra.mxu0 %v1041
        %1068 = vmatpush.bf16.msra.mxu0 %v1040
        %1069 = vmatpush.bf16.msra.mxu0 %v1039
        %1070 = vmatmul.bf16.gmra.mxu0 %v973
        %v1071 = vpop.f32.mrf.mxu0
        %v1072 = vadd.f32 %v997, %v1071
        %v1073 = vpop.f32.mrf.mxu0
        %v1074 = vadd.f32 %v997, %v1073
        %1075 = vdwg.mxu0
        %1076 = vmatpush.bf16.msra.mxu0 0
        %1077 = vmatpush.bf16.msra.mxu0 0
        %1078 = vmatpush.bf16.msra.mxu0 0
        %1079 = vmatpush.bf16.msra.mxu0 0
        %1080 = vmatpush.bf16.msra.mxu0 0
        %1081 = vmatpush.bf16.msra.mxu0 0
        %1082 = vmatpush.bf16.msra.mxu0 %v1048
        %1083 = vmatpush.bf16.msra.mxu0 %v1047
        %1084 = vmatmul.bf16.gmra.mxu0 %v1060
        %v1085 = vpop.f32.mrf.mxu0
        %v1086 = vadd.f32 %v1072, %v1085
        %v1087 = vpop.f32.mrf.mxu0
        %v1088 = vadd.f32 %v1074, %v1087
        %1089 = vdwg.mxu0
        %v1090 = vmax.f32 %v1086, 0.0
        %v1091 = vmax.f32 %v1088, 0.0
        %vm1092 = vcmask 523264
        %1093 = vst.msk [vmem:[#allocation8] sm:$0xff] %vm1092, %v1090
        %vm1094 = vcmask 516096
        %1095 = vst.msk [vmem:[#allocation8 + $0x8] sm:$0x1] %vm1094, %v1091
        %v1096 = vld [vmem:[%s8] sm:$0x1]
        %v1097 = vld [vmem:[#allocation8] sm:$0x1]
        %v1098 = vld [vmem:[#allocation8 + $0x1] sm:$0x1]
        %v1099 = vmax.f32 %v1097, %v1098
        %v1100 = vpack.c.bf16 %v1099, %v1099
        %v1101 = vld [vmem:[%s7] sm:$0xf]
        %v1102 = vld [vmem:[%s7 + $0x4] sm:$0xf]
        %v1103 = vld [vmem:[%s7 + $0x8] sm:$0xf]
        %v1104 = vld [vmem:[%s7 + $0xc] sm:$0xf]
        %v1105 = vld [vmem:[%s7 + $0x10] sm:$0xf]
        %v1106 = vld [vmem:[%s7 + $0x14] sm:$0xf]
        %v1107 = vld [vmem:[%s7 + $0x18] sm:$0xf]
        %v1108 = vld [vmem:[%s7 + $0x1c] sm:$0xf]
        %v1117 = vunpack.c.l.b16 %v1101
        %v1118 = vunpack.c.l.b16 %v1102
        %v1119 = vunpack.c.l.b16 %v1103
        %v1120 = vunpack.c.l.b16 %v1104
        %v1121 = vunpack.c.l.b16 %v1105
        %v1122 = vunpack.c.l.b16 %v1106
        %v1123 = vunpack.c.l.b16 %v1107
        %v1124 = vunpack.c.l.b16 %v1108
        %v1125 = vpack.c.b16 %v1118, %v1117
        %v1126 = vpack.c.b16 %v1120, %v1119
        %v1127 = vpack.c.b16 %v1122, %v1121
        %v1128 = vpack.c.b16 %v1124, %v1123
        %v1134 = vsel %vm1092, %v1100, 0
        %1136 = vmatpush.bf16.msra.mxu0 0
        %1137 = vmatpush.bf16.msra.mxu0 0
        %1138 = vmatpush.bf16.msra.mxu0 0
        %1139 = vmatpush.bf16.msra.mxu0 0
        %1140 = vmatpush.bf16.msra.mxu0 %v1128
        %1141 = vmatpush.bf16.msra.mxu0 %v1127
        %1142 = vmatpush.bf16.msra.mxu0 %v1126
        %1143 = vmatpush.bf16.msra.mxu0 %v1125
        %1144 = vmatmul.bf16.gmra.mxu0 %v1134
        %v1145 = vpop.f32.mrf.mxu0
        %v1146 = vadd.f32 0.0, %v1145
        %v1147 = vpop.f32.mrf.mxu0
        %1148 = vdwg.mxu0
        %v1149 = vadd.f32 %v1096, %v1146
        %v1150 = vld [vmem:[#allocation8 + $0x2] sm:$0x1]
        %v1151 = vld [vmem:[#allocation8 + $0x3] sm:$0x1]
        %v1152 = vmax.f32 %v1150, %v1151
        %v1153 = vpack.c.bf16 %v1152, %v1152
        %s1154 = scalar_lea.vmem %s7, 32
        %v1155 = vld [vmem:[%s1154] sm:$0xf]
        %v1156 = vld [vmem:[%s1154 + $0x4] sm:$0xf]
        %v1157 = vld [vmem:[%s1154 + $0x8] sm:$0xf]
        %v1158 = vld [vmem:[%s1154 + $0xc] sm:$0xf]
        %v1159 = vld [vmem:[%s1154 + $0x10] sm:$0xf]
        %v1160 = vld [vmem:[%s1154 + $0x14] sm:$0xf]
        %v1161 = vld [vmem:[%s1154 + $0x18] sm:$0xf]
        %v1162 = vld [vmem:[%s1154 + $0x1c] sm:$0xf]
        %v1171 = vunpack.c.l.b16 %v1155
        %v1172 = vunpack.c.l.b16 %v1156
        %v1173 = vunpack.c.l.b16 %v1157
        %v1174 = vunpack.c.l.b16 %v1158
        %v1175 = vunpack.c.l.b16 %v1159
        %v1176 = vunpack.c.l.b16 %v1160
        %v1177 = vunpack.c.l.b16 %v1161
        %v1178 = vunpack.c.l.b16 %v1162
        %v1179 = vpack.c.b16 %v1172, %v1171
        %v1180 = vpack.c.b16 %v1174, %v1173
        %v1181 = vpack.c.b16 %v1176, %v1175
        %v1182 = vpack.c.b16 %v1178, %v1177
        %v1188 = vsel %vm1092, %v1153, 0
        %1190 = vmatpush.bf16.msra.mxu0 0
        %1191 = vmatpush.bf16.msra.mxu0 0
        %1192 = vmatpush.bf16.msra.mxu0 0
        %1193 = vmatpush.bf16.msra.mxu0 0
        %1194 = vmatpush.bf16.msra.mxu0 %v1182
        %1195 = vmatpush.bf16.msra.mxu0 %v1181
        %1196 = vmatpush.bf16.msra.mxu0 %v1180
        %1197 = vmatpush.bf16.msra.mxu0 %v1179
        %1198 = vmatmul.bf16.gmra.mxu0 %v1188
        %v1199 = vpop.f32.mrf.mxu0
        %v1200 = vadd.f32 0.0, %v1199
        %v1201 = vpop.f32.mrf.mxu0
        %1202 = vdwg.mxu0
        %v1203 = vadd.f32 %v1149, %v1200
        %v1204 = vld [vmem:[#allocation8 + $0x4] sm:$0x1]
        %v1205 = vld [vmem:[#allocation8 + $0x5] sm:$0x1]
        %v1206 = vmax.f32 %v1204, %v1205
        %v1207 = vpack.c.bf16 %v1206, %v1206
        %s1208 = scalar_lea.vmem %s7, 64
        %v1209 = vld [vmem:[%s1208] sm:$0xf]
        %v1210 = vld [vmem:[%s1208 + $0x4] sm:$0xf]
        %v1211 = vld [vmem:[%s1208 + $0x8] sm:$0xf]
        %v1212 = vld [vmem:[%s1208 + $0xc] sm:$0xf]
        %v1213 = vld [vmem:[%s1208 + $0x10] sm:$0xf]
        %v1214 = vld [vmem:[%s1208 + $0x14] sm:$0xf]
        %v1215 = vld [vmem:[%s1208 + $0x18] sm:$0xf]
        %v1216 = vld [vmem:[%s1208 + $0x1c] sm:$0xf]
        %v1225 = vunpack.c.l.b16 %v1209
        %v1226 = vunpack.c.l.b16 %v1210
        %v1227 = vunpack.c.l.b16 %v1211
        %v1228 = vunpack.c.l.b16 %v1212
        %v1229 = vunpack.c.l.b16 %v1213
        %v1230 = vunpack.c.l.b16 %v1214
        %v1231 = vunpack.c.l.b16 %v1215
        %v1232 = vunpack.c.l.b16 %v1216
        %v1233 = vpack.c.b16 %v1226, %v1225
        %v1234 = vpack.c.b16 %v1228, %v1227
        %v1235 = vpack.c.b16 %v1230, %v1229
        %v1236 = vpack.c.b16 %v1232, %v1231
        %v1242 = vsel %vm1092, %v1207, 0
        %1244 = vmatpush.bf16.msra.mxu0 0
        %1245 = vmatpush.bf16.msra.mxu0 0
        %1246 = vmatpush.bf16.msra.mxu0 0
        %1247 = vmatpush.bf16.msra.mxu0 0
        %1248 = vmatpush.bf16.msra.mxu0 %v1236
        %1249 = vmatpush.bf16.msra.mxu0 %v1235
        %1250 = vmatpush.bf16.msra.mxu0 %v1234
        %1251 = vmatpush.bf16.msra.mxu0 %v1233
        %1252 = vmatmul.bf16.gmra.mxu0 %v1242
        %v1253 = vpop.f32.mrf.mxu0
        %v1254 = vadd.f32 0.0, %v1253
        %v1255 = vpop.f32.mrf.mxu0
        %1256 = vdwg.mxu0
        %v1257 = vadd.f32 %v1203, %v1254
        %v1258 = vld [vmem:[#allocation8 + $0x6] sm:$0x1]
        %v1259 = vld [vmem:[#allocation8 + $0x7] sm:$0x1]
        %v1260 = vmax.f32 %v1258, %v1259
        %v1261 = vpack.c.bf16 %v1260, %v1260
        %s1262 = scalar_lea.vmem %s7, 96
        %v1263 = vld [vmem:[%s1262] sm:$0xf]
        %v1264 = vld [vmem:[%s1262 + $0x4] sm:$0xf]
        %v1265 = vld [vmem:[%s1262 + $0x8] sm:$0xf]
        %v1266 = vld [vmem:[%s1262 + $0xc] sm:$0xf]
        %v1267 = vld [vmem:[%s1262 + $0x10] sm:$0xf]
        %v1268 = vld [vmem:[%s1262 + $0x14] sm:$0xf]
        %v1269 = vld [vmem:[%s1262 + $0x18] sm:$0xf]
        %v1270 = vld [vmem:[%s1262 + $0x1c] sm:$0xf]
        %v1279 = vunpack.c.l.b16 %v1263
        %v1280 = vunpack.c.l.b16 %v1264
        %v1281 = vunpack.c.l.b16 %v1265
        %v1282 = vunpack.c.l.b16 %v1266
        %v1283 = vunpack.c.l.b16 %v1267
        %v1284 = vunpack.c.l.b16 %v1268
        %v1285 = vunpack.c.l.b16 %v1269
        %v1286 = vunpack.c.l.b16 %v1270
        %v1287 = vpack.c.b16 %v1280, %v1279
        %v1288 = vpack.c.b16 %v1282, %v1281
        %v1289 = vpack.c.b16 %v1284, %v1283
        %v1290 = vpack.c.b16 %v1286, %v1285
        %v1296 = vsel %vm1092, %v1261, 0
        %1298 = vmatpush.bf16.msra.mxu0 0
        %1299 = vmatpush.bf16.msra.mxu0 0
        %1300 = vmatpush.bf16.msra.mxu0 0
        %1301 = vmatpush.bf16.msra.mxu0 0
        %1302 = vmatpush.bf16.msra.mxu0 %v1290
        %1303 = vmatpush.bf16.msra.mxu0 %v1289
        %1304 = vmatpush.bf16.msra.mxu0 %v1288
        %1305 = vmatpush.bf16.msra.mxu0 %v1287
        %1306 = vmatmul.bf16.gmra.mxu0 %v1296
        %v1307 = vpop.f32.mrf.mxu0
        %v1308 = vadd.f32 0.0, %v1307
        %v1309 = vpop.f32.mrf.mxu0
        %1310 = vdwg.mxu0
        %v1311 = vadd.f32 %v1257, %v1308
        %vm1312 = vcmask 57344
        %1313 = vst.msk [vmem:[%s324] sm:$0x1] %vm1312, %v1311
        %s1314 = sand.u32 %s225, 1
        %s1315 = scalar_lea.sflag [#allocation10], %s1314
        %s1316 = sand.u32 %s225, 1
        %s1317 = scalar_lea.vmem [#allocation9], %s1316
        // Predicated region
        $region57: #{tpu_custom_call.1} parent=55 // pred_check
          %p1318 = pneg %p235
        $region58: #{tpu_custom_call.1} parent=55 // pred_check_branch
          %1320 = sbr.rel (%p1318) target = $region60
        $region59: #{tpu_custom_call.1} parent=55 // pred_region
          %1322 = vsyncadd %s1315, 0
          %s1323 = scalar_lea.hbm %s9, %s23
          %s1325 = sshll.u32 %s1317, 4
          %s1326 = int_to_ptr.vmem [resolvable:$true] %s1325
          %s1327 = sshll.u32 %s1323, 4
          %s1328 = int_to_ptr.hbm [resolvable:$true] %s1327
          %1330 = dma.vmem_to_hbm [thread:$0]  %s1326, 16, %s1328, %s1315
        $region60: #{tpu_custom_call.1} parent=55 // pred_fallthru
          _
      $region56: #{tpu_custom_call.1} parent=5 // pred_fallthru
        _
      %p1331 = scmp.le.s32.totalorder 2, %s18
      // Predicated region
      $region61: #{tpu_custom_call.1} parent=5 // pred_check
        %p1332 = pneg %p1331
      $region62: #{tpu_custom_call.1} parent=5 // pred_check_branch
        %1334 = sbr.rel (%p1332) target = $region64
      $region63: #{tpu_custom_call.1} parent=5 // pred_region
        %s1335 = ssub.s32 %s18, 2
        // Predicated region
        $region65: #{tpu_custom_call.1} parent=63 // pred_check
          %p1336 = pneg %p241
        $region66: #{tpu_custom_call.1} parent=63 // pred_check_branch
          %1338 = sbr.rel (%p1336) target = $region68
        $region67: #{tpu_custom_call.1} parent=63 // pred_region
          %s1339 = sand.u32 %s226, 1
          %s1340 = scalar_lea.sflag [#allocation10], %s1339
          %s1341 = sand.u32 %s226, 1
          %s1342 = scalar_lea.vmem [#allocation9], %s1341
          %1344 = dma.done %s1340, 16
        $region68: #{tpu_custom_call.1} parent=63 // pred_fallthru
          _
      $region64: #{tpu_custom_call.1} parent=5 // pred_fallthru
        _
    $region6: #{tpu_custom_call.1} parent=1 // loop_footer
      %s22 = sadd.s32 1, %s18
    $region7: #{tpu_custom_call.1} parent=1 // loop_footer_branch
      %17 = sbr.rel target = $region3
    $region8: #{tpu_custom_call.1} parent=1 // loop_exit
      _
    %1345 = vsyncpa [#allocation10], 1
    %s1346 = scalar_lea.sflag [#allocation10], 1
    %1347 = vsyncpa %s1346, 1

</llo_original>
